<compile_context>
chip_gen: v5e
topology: v5e:2x2
jax: 0.10.0
libtpu: 0.0.40
codegen_flags: <defaults>
</compile_context>

<pallas_src>
import math
import functools

import jax
import jax.numpy as jnp
from jax.experimental import pallas as pl
from jax.experimental.pallas import tpu as pltpu


# ---------------------------------------------------------------------------
# In-kernel helpers
# ---------------------------------------------------------------------------
def _norm(x, alpha, bias, d, eps=1e-6):
    """Tutorial `Norm`: alpha * (x - mean) / (std + eps) + bias (unbiased std)."""
    mean = jnp.mean(x, axis=-1, keepdims=True)
    xc = x - mean
    var = jnp.sum(xc * xc, axis=-1, keepdims=True) / (d - 1)
    # Exact division here (only 2L+1 norms, tiny (M,1) divide); approx
    # reciprocal is reserved for the softmax denominator.
    return alpha * (xc / (jnp.sqrt(var) + eps)) + bias


# ---------------------------------------------------------------------------
# Fused encoder-stack kernel: grid = (batch_tiles, layer)
# ---------------------------------------------------------------------------
def encoder_stack_kernel(x_ref, mask_ref,
                         n1a_ref, n1b_ref,
                         wqkv_ref, bqkv_ref, wo_ref, bo_ref,
                         n2a_ref, n2b_ref,
                         w1_ref, bf1_ref, w2_ref, bf2_ref,
                         fna_ref, fnb_ref,
                         o_ref, x_scr, *, heads, batch_tile, seq_len):
    l = pl.program_id(1)
    n_layers = pl.num_programs(1)

    # Load the batch tile's activations into the VMEM-resident scratch only at
    # the first layer; they stay resident across the whole layer stack.
    @pl.when(l == 0)
    def _():
        x_scr[...] = x_ref[...]

    x = x_scr[...]                       # (Bt*S, D) f32
    M, D = x.shape
    Bt, S, H = batch_tile, seq_len, heads
    Dh = D // H
    scale = 1.0 / math.sqrt(Dh)
    mask = mask_ref[...]                 # (Bt, S, S) additive attention mask

    # Per-layer slices of the VMEM-resident weight stacks (weights were DMA'd
    # from HBM once for the whole call; dynamic leading-axis index picks the
    # current layer's slab).
    n1a, n1b = n1a_ref[l], n1b_ref[l]
    wqkv, bqkv = wqkv_ref[l], bqkv_ref[l]
    wo, bo = wo_ref[l], bo_ref[l]
    n2a, n2b = n2a_ref[l], n2b_ref[l]
    w1, bf1 = w1_ref[l], bf1_ref[l]
    w2, bf2 = w2_ref[l], bf2_ref[l]

    # ---- self-attention sublayer (pre-norm + residual) ----
    x2 = _norm(x, n1a, n1b, D)
    # Fused QKV projection: one lane-dense (M, D) @ (D, 3*D) matmul, f32 acc.
    qkv = jnp.dot(x2.astype(jnp.bfloat16), wqkv,
                  preferred_element_type=jnp.float32) + bqkv        # (M, 3D)

    # The score / PV matmuls are inherently per-head; the static loop below
    # traces the same H small matmuls a batched einsum would, but keeps all
    # intermediates 2-D/3-D and avoids lane<->sublane transposes.
    head_outs = []
    for h in range(H):
        q3 = ((qkv[:, h * Dh:(h + 1) * Dh] * scale)                 # scale folded into q
              .astype(jnp.bfloat16).reshape(Bt, S, Dh))
        k3 = qkv[:, D + h * Dh:D + (h + 1) * Dh].astype(jnp.bfloat16).reshape(Bt, S, Dh)
        v3 = qkv[:, 2 * D + h * Dh:2 * D + (h + 1) * Dh].astype(jnp.bfloat16).reshape(Bt, S, Dh)

        s = jnp.einsum('bqd,bkd->bqk', q3, k3,
                       preferred_element_type=jnp.float32) + mask   # (Bt, S, S)
        s = s - jnp.max(s, axis=-1, keepdims=True)
        p = jnp.exp(s)
        denom = jnp.sum(p, axis=-1, keepdims=True)                  # (Bt, S, 1)
        o3 = jnp.einsum('bqk,bkd->bqd', p.astype(jnp.bfloat16), v3,
                        preferred_element_type=jnp.float32)         # (Bt, S, Dh)
        # Deferred softmax normalization: O(S*Dh) multiply instead of O(S*S).
        # NOTE: a fully-masked (all -inf) row still yields NaN, as in PyTorch.
        o3 = o3 * pl.reciprocal(denom, approx=True)
        head_outs.append(o3.reshape(M, Dh))

    # Merge heads along lanes; one (M, D) @ (D, D) output projection -- the
    # cross-head reduction happens inside the MXU accumulator.
    oh = jnp.concatenate(head_outs, axis=-1).astype(jnp.bfloat16)   # (M, D)
    attn = jnp.dot(oh, wo, preferred_element_type=jnp.float32) + bo
    x = x + attn                                                    # dropout_1: identity (eval)

    # ---- feed-forward sublayer (pre-norm + residual) ----
    x2 = _norm(x, n2a, n2b, D)
    h1 = jnp.dot(x2.astype(jnp.bfloat16), w1,
                 preferred_element_type=jnp.float32) + bf1
    h1 = jnp.maximum(h1, 0.0)                                       # ReLU
    ff = jnp.dot(h1.astype(jnp.bfloat16), w2,
                 preferred_element_type=jnp.float32) + bf2
    x = x + ff                                                      # dropout_2: identity (eval)

    x_scr[...] = x

    # Final Norm + single lane-dense HBM write-back after the last layer.
    @pl.when(l == n_layers - 1)
    def _():
        o_ref[...] = _norm(x, fna_ref[...], fnb_ref[...], D).astype(o_ref.dtype)


# ---------------------------------------------------------------------------
# Wrapper around pallas_call
# ---------------------------------------------------------------------------
def _default_vmem_limit():
    # Re-derive the VMEM budget per chip generation (v7x: 64 MiB/TC,
    # v5e/v6e: 128 MiB); leave ~25% headroom for Mosaic internals.
    try:
        cap = pltpu.get_tpu_info().vmem_capacity_bytes
        return min(int(cap * 3 // 4), 100 * 1024 * 1024)
    except Exception:
        return 48 * 1024 * 1024


def encoder_stack(x, mask, stacked, norm_a, norm_b, heads, batch_tile=None):
    B, S, D = x.shape
    L = stacked["wqkv"].shape[0]
    assert D % heads == 0

    if batch_tile is None:
        # Keep the leading "parallel" grid axis with an even extent >= 2 so
        # both v7x TensorCores get work; for realistic shapes raise Bt as far
        # as VMEM allows (weights stay resident regardless).
        batch_tile = B // 2 if (B >= 2 and B % 2 == 0) else 1
    Bt = batch_tile
    assert B % Bt == 0
    assert (Bt * S) % 8 == 0 or Bt * S == B * S   # (8, 128) block constraint

    # Lane-dense 2-D activation layout for the matmuls; host-side reshape is free.
    x2d = x.reshape(B * S, D)

    kernel = functools.partial(encoder_stack_kernel, heads=heads,
                               batch_tile=Bt, seq_len=S)

    weight_names = ["n1a", "n1b", "wqkv", "bqkv", "wo", "bo",
                    "n2a", "n2b", "w1", "bf1", "w2", "bf2"]
    weight_args = [stacked[name] for name in weight_names]

    def resident_spec(arr):
        # Full array as a single block with a constant index map: Pallas DMAs
        # it once and keeps it VMEM-resident for the entire call.  (If the
        # full stack does not fit VMEM, switch to per-layer (1, ...) blocks
        # with pipeline_mode=pl.Buffered(3) instead.)
        nd = arr.ndim
        return pl.BlockSpec(arr.shape, lambda b, l, _nd=nd: (0,) * _nd)

    in_specs = ([pl.BlockSpec((Bt * S, D), lambda b, l: (b, 0)),
                 pl.BlockSpec((Bt, S, S), lambda b, l: (b, 0, 0))]
                + [resident_spec(a) for a in weight_args]
                + [resident_spec(norm_a), resident_spec(norm_b)])

    out2d = pl.pallas_call(
        kernel,
        out_shape=jax.ShapeDtypeStruct((B * S, D), x.dtype),
        grid=(B // Bt, L),
        in_specs=in_specs,
        out_specs=pl.BlockSpec((Bt * S, D), lambda b, l: (b, 0)),
        scratch_shapes=[pltpu.VMEM((Bt * S, D), jnp.float32)],
        compiler_params=pltpu.CompilerParams(
            dimension_semantics=("parallel", "arbitrary"),
            vmem_limit_bytes=_default_vmem_limit()),
    )(x2d, mask, *weight_args, norm_a, norm_b)
    return out2d.reshape(B, S, D)


# ---------------------------------------------------------------------------
# Glue: embedding, positional encoding, parameter init / packing
# ---------------------------------------------------------------------------
def positional_encoding(seq_len, d_model):
    pos = jnp.arange(seq_len, dtype=jnp.float32)[:, None]
    i = jnp.arange(0, d_model, 2, dtype=jnp.float32)
    div = jnp.power(10000.0, i / d_model)
    pe = jnp.zeros((seq_len, d_model), jnp.float32)
    pe = pe.at[:, 0::2].set(jnp.sin(pos / div))
    pe = pe.at[:, 1::2].set(jnp.cos(pos / div))
    return pe


def init_params(key, vocab_size, d_model, d_ff):
    ks = jax.random.split(key, 8)

    def lin(k, shape, fan_in):
        lim = 1.0 / math.sqrt(fan_in)
        return jax.random.uniform(k, shape, jnp.float32, -lim, lim)

    emb = jax.random.normal(ks[0], (vocab_size, d_model), jnp.float32)
    layer = dict(
        n1a=jnp.ones((1, d_model), jnp.float32), n1b=jnp.zeros((1, d_model), jnp.float32),
        wq=lin(ks[1], (d_model, d_model), d_model), bq=jnp.zeros((1, d_model), jnp.float32),
        wk=lin(ks[2], (d_model, d_model), d_model), bk=jnp.zeros((1, d_model), jnp.float32),
        wv=lin(ks[3], (d_model, d_model), d_model), bv=jnp.zeros((1, d_model), jnp.float32),
        wo=lin(ks[4], (d_model, d_model), d_model), bo=jnp.zeros((1, d_model), jnp.float32),
        n2a=jnp.ones((1, d_model), jnp.float32), n2b=jnp.zeros((1, d_model), jnp.float32),
        w1=lin(ks[5], (d_model, d_ff), d_model), bf1=jnp.zeros((1, d_ff), jnp.float32),
        w2=lin(ks[6], (d_ff, d_model), d_ff), bf2=jnp.zeros((1, d_model), jnp.float32),
    )
    norm_a = jnp.ones((1, d_model), jnp.float32)
    norm_b = jnp.zeros((1, d_model), jnp.float32)
    return emb, layer, norm_a, norm_b


def pack_layer_params(layers, heads):
    """Stack per-layer params along a leading L axis and pack for the kernel.

    Q|K|V weights are fused column-wise into one (D, 3*D) matrix (lane-dense
    matmul N dim); biases are fused into one (1, 3*D) row.  Wo stays (D, D):
    the kernel merges heads along lanes in the same column order, so the
    original Wo applies unchanged.  Weight packing assumes the x @ W (in, out)
    convention; porting real nn.Linear weights needs a transpose first.
    """
    d_model = layers[0]["wq"].shape[0]
    assert d_model % heads == 0

    def one(p):
        return dict(
            n1a=p["n1a"][None], n1b=p["n1b"][None],
            wqkv=jnp.concatenate([p["wq"], p["wk"], p["wv"]], axis=1).astype(jnp.bfloat16),
            bqkv=jnp.concatenate([p["bq"], p["bk"], p["bv"]], axis=1)[None],
            wo=p["wo"].astype(jnp.bfloat16),
            bo=p["bo"][None],
            n2a=p["n2a"][None], n2b=p["n2b"][None],
            w1=p["w1"].astype(jnp.bfloat16), bf1=p["bf1"][None],
            w2=p["w2"].astype(jnp.bfloat16), bf2=p["bf2"][None],
        )

    per_layer = [one(p) for p in layers]
    stacked = {}
    for k in per_layer[0]:
        arrs = [d[k] for d in per_layer]
        # (1, ...) bias/norm entries already carry the new leading axis slot.
        stacked[k] = jnp.concatenate(arrs, axis=0) if arrs[0].ndim == 3 and arrs[0].shape[0] == 1 \
            else jnp.stack(arrs, axis=0)
    return stacked


def encoder_forward(src, mask, emb, stacked, norm_a, norm_b, heads):
    d_model = emb.shape[1]
    seq_len = src.shape[1]
    x = emb[src]                                                 # Embedder (gather = XLA glue)
    x = x * math.sqrt(d_model) + positional_encoding(seq_len, d_model)[None]
    return encoder_stack(x, mask, stacked, norm_a, norm_b, heads)


# ---------------------------------------------------------------------------
if __name__ == "__main__":
    vocab_size, d_model, n_layers, heads = 16, 32, 2, 4
    d_ff = 64            # FeedForward hidden dim (tutorial default 2048; small here)
    B, S = 2, 8

    key = jax.random.PRNGKey(0)
    k_src, k_params = jax.random.split(key)

    src = jax.random.randint(k_src, (B, S), 0, vocab_size)       # token ids (B, S)
    mask = jnp.zeros((B, S, S), jnp.float32)                     # additive mask: no masking

    emb, layer, norm_a, norm_b = init_params(k_params, vocab_size, d_model, d_ff)
    # generate_multiple_layers deep-copies ONE layer -> all N layers share the
    # same initial parameters; mirror that by stacking the same layer N times.
    stacked = pack_layer_params([layer] * n_layers, heads)

    out = encoder_forward(src, mask, emb, stacked, norm_a, norm_b, heads)
    out = jax.block_until_ready(out)
    assert out.shape == (B, S, d_model)
    assert bool(jnp.all(jnp.isfinite(out)))
    print("KERNEL_OK")
</pallas_src>

<mosaic_0001>
module attributes {stable_mosaic.version = 11 : i64} {
  func.func @encoder_stack_kernel(%arg0: i32, %arg1: i32, %arg2: memref<8x32xf32, #tpu.memory_space<vmem>>, %arg3: memref<1x8x8xf32, #tpu.memory_space<vmem>>, %arg4: memref<2x1x32xf32, #tpu.memory_space<vmem>>, %arg5: memref<2x1x32xf32, #tpu.memory_space<vmem>>, %arg6: memref<2x32x96xbf16, #tpu.memory_space<vmem>>, %arg7: memref<2x1x96xf32, #tpu.memory_space<vmem>>, %arg8: memref<2x32x32xbf16, #tpu.memory_space<vmem>>, %arg9: memref<2x1x32xf32, #tpu.memory_space<vmem>>, %arg10: memref<2x1x32xf32, #tpu.memory_space<vmem>>, %arg11: memref<2x1x32xf32, #tpu.memory_space<vmem>>, %arg12: memref<2x32x64xbf16, #tpu.memory_space<vmem>>, %arg13: memref<2x1x64xf32, #tpu.memory_space<vmem>>, %arg14: memref<2x64x32xbf16, #tpu.memory_space<vmem>>, %arg15: memref<2x1x32xf32, #tpu.memory_space<vmem>>, %arg16: memref<1x32xf32, #tpu.memory_space<vmem>>, %arg17: memref<1x32xf32, #tpu.memory_space<vmem>>, %arg18: memref<8x32xf32, #tpu.memory_space<vmem>>, %arg19: memref<8x32xf32, #tpu.memory_space<vmem>>) attributes {dimension_semantics = [#tpu.dimension_semantics<parallel>, #tpu.dimension_semantics<arbitrary>], iteration_bounds = array<i64: 2, 2>, scalar_prefetch = 0 : i64, scratch_operands = 1 : i64, tpu.core_type = #tpu.core_type<tc>, window_params = [{transform_indices = @transform_0, window_bounds = array<i64: 8, 32>}, {transform_indices = @transform_1, window_bounds = array<i64: 1, 8, 8>}, {pipeline_mode = #tpu.pipeline_mode<synchronous>, transform_indices = @transform_2, window_bounds = array<i64: 2, 1, 32>}, {pipeline_mode = #tpu.pipeline_mode<synchronous>, transform_indices = @transform_3, window_bounds = array<i64: 2, 1, 32>}, {pipeline_mode = #tpu.pipeline_mode<synchronous>, transform_indices = @transform_4, window_bounds = array<i64: 2, 32, 96>}, {pipeline_mode = #tpu.pipeline_mode<synchronous>, transform_indices = @transform_5, window_bounds = array<i64: 2, 1, 96>}, {pipeline_mode = #tpu.pipeline_mode<synchronous>, transform_indices = @transform_6, window_bounds = array<i64: 2, 32, 32>}, {pipeline_mode = #tpu.pipeline_mode<synchronous>, transform_indices = @transform_7, window_bounds = array<i64: 2, 1, 32>}, {pipeline_mode = #tpu.pipeline_mode<synchronous>, transform_indices = @transform_8, window_bounds = array<i64: 2, 1, 32>}, {pipeline_mode = #tpu.pipeline_mode<synchronous>, transform_indices = @transform_9, window_bounds = array<i64: 2, 1, 32>}, {pipeline_mode = #tpu.pipeline_mode<synchronous>, transform_indices = @transform_10, window_bounds = array<i64: 2, 32, 64>}, {pipeline_mode = #tpu.pipeline_mode<synchronous>, transform_indices = @transform_11, window_bounds = array<i64: 2, 1, 64>}, {pipeline_mode = #tpu.pipeline_mode<synchronous>, transform_indices = @transform_12, window_bounds = array<i64: 2, 64, 32>}, {pipeline_mode = #tpu.pipeline_mode<synchronous>, transform_indices = @transform_13, window_bounds = array<i64: 2, 1, 32>}, {pipeline_mode = #tpu.pipeline_mode<synchronous>, transform_indices = @transform_14, window_bounds = array<i64: 1, 32>}, {pipeline_mode = #tpu.pipeline_mode<synchronous>, transform_indices = @transform_15, window_bounds = array<i64: 1, 32>}, {transform_indices = @transform_16, window_bounds = array<i64: 8, 32>}]} {
    %c0_i32 = arith.constant 0 : i32
    %0 = arith.cmpi eq, %arg1, %c0_i32 : i32
    %1 = arith.extui %0 : i1 to i32
    %c0_i32_0 = arith.constant 0 : i32
    %2 = arith.cmpi ne, %1, %c0_i32_0 : i32
    scf.if %2 {
      %c0_66 = arith.constant 0 : index
      %c0_67 = arith.constant 0 : index
      %210 = vector.load %arg2[%c0_66, %c0_67] : memref<8x32xf32, #tpu.memory_space<vmem>>, vector<8x32xf32>
      %c0_68 = arith.constant 0 : index
      %c0_69 = arith.constant 0 : index
      %211 = vector.load %arg19[%c0_68, %c0_69] : memref<8x32xf32, #tpu.memory_space<vmem>>, vector<8x32xf32>
      tpu.vector_store %arg19[%c0_68, %c0_69], %210 {strides = array<i32>} : memref<8x32xf32, #tpu.memory_space<vmem>>, vector<8x32xf32>,
    } else {
    }
    %c0 = arith.constant 0 : index
    %c0_1 = arith.constant 0 : index
    %3 = vector.load %arg19[%c0, %c0_1] : memref<8x32xf32, #tpu.memory_space<vmem>>, vector<8x32xf32>
    %c0_2 = arith.constant 0 : index
    %c0_3 = arith.constant 0 : index
    %c0_4 = arith.constant 0 : index
    %4 = vector.load %arg3[%c0_2, %c0_3, %c0_4] : memref<1x8x8xf32, #tpu.memory_space<vmem>>, vector<1x8x8xf32>
    %5 = arith.index_cast %arg1 : i32 to index
    %c0_5 = arith.constant 0 : index
    %c0_6 = arith.constant 0 : index
    %6 = vector.load %arg4[%5, %c0_5, %c0_6] : memref<2x1x32xf32, #tpu.memory_space<vmem>>, vector<1x1x32xf32>
    %7 = vector.shape_cast %6 : vector<1x1x32xf32> to vector<1x32xf32>
    %8 = arith.index_cast %arg1 : i32 to index
    %c0_7 = arith.constant 0 : index
    %c0_8 = arith.constant 0 : index
    %9 = vector.load %arg5[%8, %c0_7, %c0_8] : memref<2x1x32xf32, #tpu.memory_space<vmem>>, vector<1x1x32xf32>
    %10 = vector.shape_cast %9 : vector<1x1x32xf32> to vector<1x32xf32>
    %11 = arith.index_cast %arg1 : i32 to index
    %c0_9 = arith.constant 0 : index
    %c0_10 = arith.constant 0 : index
    %12 = vector.load %arg6[%11, %c0_9, %c0_10] : memref<2x32x96xbf16, #tpu.memory_space<vmem>>, vector<1x32x96xbf16>
    %13 = vector.shape_cast %12 : vector<1x32x96xbf16> to vector<32x96xbf16>
    %14 = arith.index_cast %arg1 : i32 to index
    %c0_11 = arith.constant 0 : index
    %c0_12 = arith.constant 0 : index
    %15 = vector.load %arg7[%14, %c0_11, %c0_12] : memref<2x1x96xf32, #tpu.memory_space<vmem>>, vector<1x1x96xf32>
    %16 = vector.shape_cast %15 : vector<1x1x96xf32> to vector<1x96xf32>
    %17 = arith.index_cast %arg1 : i32 to index
    %c0_13 = arith.constant 0 : index
    %c0_14 = arith.constant 0 : index
    %18 = vector.load %arg8[%17, %c0_13, %c0_14] : memref<2x32x32xbf16, #tpu.memory_space<vmem>>, vector<1x32x32xbf16>
    %19 = vector.shape_cast %18 : vector<1x32x32xbf16> to vector<32x32xbf16>
    %20 = arith.index_cast %arg1 : i32 to index
    %c0_15 = arith.constant 0 : index
    %c0_16 = arith.constant 0 : index
    %21 = vector.load %arg9[%20, %c0_15, %c0_16] : memref<2x1x32xf32, #tpu.memory_space<vmem>>, vector<1x1x32xf32>
    %22 = vector.shape_cast %21 : vector<1x1x32xf32> to vector<1x32xf32>
    %23 = arith.index_cast %arg1 : i32 to index
    %c0_17 = arith.constant 0 : index
    %c0_18 = arith.constant 0 : index
    %24 = vector.load %arg10[%23, %c0_17, %c0_18] : memref<2x1x32xf32, #tpu.memory_space<vmem>>, vector<1x1x32xf32>
    %25 = vector.shape_cast %24 : vector<1x1x32xf32> to vector<1x32xf32>
    %26 = arith.index_cast %arg1 : i32 to index
    %c0_19 = arith.constant 0 : index
    %c0_20 = arith.constant 0 : index
    %27 = vector.load %arg11[%26, %c0_19, %c0_20] : memref<2x1x32xf32, #tpu.memory_space<vmem>>, vector<1x1x32xf32>
    %28 = vector.shape_cast %27 : vector<1x1x32xf32> to vector<1x32xf32>
    %29 = arith.index_cast %arg1 : i32 to index
    %c0_21 = arith.constant 0 : index
    %c0_22 = arith.constant 0 : index
    %30 = vector.load %arg12[%29, %c0_21, %c0_22] : memref<2x32x64xbf16, #tpu.memory_space<vmem>>, vector<1x32x64xbf16>
    %31 = vector.shape_cast %30 : vector<1x32x64xbf16> to vector<32x64xbf16>
    %32 = arith.index_cast %arg1 : i32 to index
    %c0_23 = arith.constant 0 : index
    %c0_24 = arith.constant 0 : index
    %33 = vector.load %arg13[%32, %c0_23, %c0_24] : memref<2x1x64xf32, #tpu.memory_space<vmem>>, vector<1x1x64xf32>
    %34 = vector.shape_cast %33 : vector<1x1x64xf32> to vector<1x64xf32>
    %35 = arith.index_cast %arg1 : i32 to index
    %c0_25 = arith.constant 0 : index
    %c0_26 = arith.constant 0 : index
    %36 = vector.load %arg14[%35, %c0_25, %c0_26] : memref<2x64x32xbf16, #tpu.memory_space<vmem>>, vector<1x64x32xbf16>
    %37 = vector.shape_cast %36 : vector<1x64x32xbf16> to vector<64x32xbf16>
    %38 = arith.index_cast %arg1 : i32 to index
    %c0_27 = arith.constant 0 : index
    %c0_28 = arith.constant 0 : index
    %39 = vector.load %arg15[%38, %c0_27, %c0_28] : memref<2x1x32xf32, #tpu.memory_space<vmem>>, vector<1x1x32xf32>
    %40 = vector.shape_cast %39 : vector<1x1x32xf32> to vector<1x32xf32>
    %cst = arith.constant dense<0.000000e+00> : vector<8xf32>
    %41 = vector.multi_reduction <add>, %3, %cst [1] : vector<8x32xf32> to vector<8xf32>
    %42 = vector.shape_cast %41 : vector<8xf32> to vector<8x1xf32>
    %cst_29 = arith.constant 3.200000e+01 : f32
    %43 = vector.broadcast %cst_29 : f32 to vector<8x1xf32>
    %44 = arith.divf %42, %43 : vector<8x1xf32>
    %45 = vector.broadcast %44 : vector<8x1xf32> to vector<8x32xf32>
    %46 = arith.subf %3, %45 : vector<8x32xf32>
    %47 = arith.mulf %46, %46 : vector<8x32xf32>
    %cst_30 = arith.constant dense<0.000000e+00> : vector<8xf32>
    %48 = vector.multi_reduction <add>, %47, %cst_30 [1] : vector<8x32xf32> to vector<8xf32>
    %49 = vector.shape_cast %48 : vector<8xf32> to vector<8x1xf32>
    %cst_31 = arith.constant 3.100000e+01 : f32
    %50 = vector.broadcast %cst_31 : f32 to vector<8x1xf32>
    %51 = arith.divf %49, %50 : vector<8x1xf32>
    %52 = math.sqrt %51 : vector<8x1xf32>
    %cst_32 = arith.constant 9.99999997E-7 : f32
    %53 = vector.broadcast %cst_32 : f32 to vector<8x1xf32>
    %54 = arith.addf %52, %53 : vector<8x1xf32>
    %55 = vector.broadcast %54 : vector<8x1xf32> to vector<8x32xf32>
    %56 = arith.divf %46, %55 : vector<8x32xf32>
    %57 = vector.broadcast %7 : vector<1x32xf32> to vector<8x32xf32>
    %58 = arith.mulf %57, %56 : vector<8x32xf32>
    %59 = vector.broadcast %10 : vector<1x32xf32> to vector<8x32xf32>
    %60 = arith.addf %58, %59 : vector<8x32xf32>
    %61 = arith.truncf %60 : vector<8x32xf32> to vector<8x32xbf16>
    %cst_33 = arith.constant dense<0.000000e+00> : vector<8x96xf32>
    %62 = tpu.matmul %61, %13, %cst_33 {dimension_numbers = #tpu.dot_dimension_numbers<[1], [0], [0], [1], [0, 0, 1, 1], [], []>} : vector<8x32xbf16>, vector<32x96xbf16>, vector<8x96xf32> -> vector<8x96xf32>
    %63 = vector.broadcast %16 : vector<1x96xf32> to vector<8x96xf32>
    %64 = arith.addf %62, %63 : vector<8x96xf32>
    %65 = vector.extract_strided_slice %64 {offsets = [0, 0], sizes = [8, 8], strides = [1, 1]} : vector<8x96xf32> to vector<8x8xf32>
    %cst_34 = arith.constant 0.353553385 : f32
    %66 = vector.broadcast %cst_34 : f32 to vector<8x8xf32>
    %67 = arith.mulf %65, %66 : vector<8x8xf32>
    %68 = arith.truncf %67 : vector<8x8xf32> to vector<8x8xbf16>
    %69 = vector.shape_cast %68 : vector<8x8xbf16> to vector<1x8x8xbf16>
    %70 = vector.extract_strided_slice %64 {offsets = [0, 32], sizes = [8, 8], strides = [1, 1]} : vector<8x96xf32> to vector<8x8xf32>
    %71 = arith.truncf %70 : vector<8x8xf32> to vector<8x8xbf16>
    %72 = vector.shape_cast %71 : vector<8x8xbf16> to vector<1x8x8xbf16>
    %73 = vector.extract_strided_slice %64 {offsets = [0, 64], sizes = [8, 8], strides = [1, 1]} : vector<8x96xf32> to vector<8x8xf32>
    %74 = arith.truncf %73 : vector<8x8xf32> to vector<8x8xbf16>
    %75 = vector.shape_cast %74 : vector<8x8xbf16> to vector<1x8x8xbf16>
    "tpu.trace_start"() <{level = 10 : i32, message = "bqd,bkd->bqk"}> : () -> ()
    %cst_35 = arith.constant dense<0.000000e+00> : vector<1x8x8xf32>
    %76 = tpu.matmul %69, %72, %cst_35 {dimension_numbers = #tpu.dot_dimension_numbers<[2], [2], [1], [1], [0, 0, 0, 1, 1, 1], [0], [0]>} : vector<1x8x8xbf16>, vector<1x8x8xbf16>, vector<1x8x8xf32> -> vector<1x8x8xf32>
    "tpu.trace_stop"() : () -> ()
    %77 = arith.addf %76, %4 : vector<1x8x8xf32>
    %cst_36 = arith.constant dense<0xFF800000> : vector<1x8xf32>
    %78 = vector.multi_reduction <maximumf>, %77, %cst_36 [2] : vector<1x8x8xf32> to vector<1x8xf32>
    %79 = vector.shape_cast %78 : vector<1x8xf32> to vector<1x8x1xf32>
    %80 = vector.broadcast %79 : vector<1x8x1xf32> to vector<1x8x8xf32>
    %81 = arith.subf %77, %80 : vector<1x8x8xf32>
    %82 = math.exp %81 : vector<1x8x8xf32>
    %cst_37 = arith.constant dense<0.000000e+00> : vector<1x8xf32>
    %83 = vector.multi_reduction <add>, %82, %cst_37 [2] : vector<1x8x8xf32> to vector<1x8xf32>
    %84 = vector.shape_cast %83 : vector<1x8xf32> to vector<1x8x1xf32>
    %85 = arith.truncf %82 : vector<1x8x8xf32> to vector<1x8x8xbf16>
    "tpu.trace_start"() <{level = 10 : i32, message = "bqk,bkd->bqd"}> : () -> ()
    %cst_38 = arith.constant dense<0.000000e+00> : vector<1x8x8xf32>
    %86 = tpu.matmul %85, %75, %cst_38 {dimension_numbers = #tpu.dot_dimension_numbers<[2], [1], [1], [2], [0, 0, 0, 1, 1, 2], [0], [0]>} : vector<1x8x8xbf16>, vector<1x8x8xbf16>, vector<1x8x8xf32> -> vector<1x8x8xf32>
    "tpu.trace_stop"() : () -> ()
    %87 = tpu.reciprocal %84 {approx = true} : vector<1x8x1xf32> -> vector<1x8x1xf32>
    %88 = vector.broadcast %87 : vector<1x8x1xf32> to vector<1x8x8xf32>
    %89 = arith.mulf %86, %88 : vector<1x8x8xf32>
    %90 = vector.shape_cast %89 : vector<1x8x8xf32> to vector<8x8xf32>
    %91 = vector.extract_strided_slice %64 {offsets = [0, 8], sizes = [8, 8], strides = [1, 1]} : vector<8x96xf32> to vector<8x8xf32>
    %cst_39 = arith.constant 0.353553385 : f32
    %92 = vector.broadcast %cst_39 : f32 to vector<8x8xf32>
    %93 = arith.mulf %91, %92 : vector<8x8xf32>
    %94 = arith.truncf %93 : vector<8x8xf32> to vector<8x8xbf16>
    %95 = vector.shape_cast %94 : vector<8x8xbf16> to vector<1x8x8xbf16>
    %96 = vector.extract_strided_slice %64 {offsets = [0, 40], sizes = [8, 8], strides = [1, 1]} : vector<8x96xf32> to vector<8x8xf32>
    %97 = arith.truncf %96 : vector<8x8xf32> to vector<8x8xbf16>
    %98 = vector.shape_cast %97 : vector<8x8xbf16> to vector<1x8x8xbf16>
    %99 = vector.extract_strided_slice %64 {offsets = [0, 72], sizes = [8, 8], strides = [1, 1]} : vector<8x96xf32> to vector<8x8xf32>
    %100 = arith.truncf %99 : vector<8x8xf32> to vector<8x8xbf16>
    %101 = vector.shape_cast %100 : vector<8x8xbf16> to vector<1x8x8xbf16>
    "tpu.trace_start"() <{level = 10 : i32, message = "bqd,bkd->bqk"}> : () -> ()
    %cst_40 = arith.constant dense<0.000000e+00> : vector<1x8x8xf32>
    %102 = tpu.matmul %95, %98, %cst_40 {dimension_numbers = #tpu.dot_dimension_numbers<[2], [2], [1], [1], [0, 0, 0, 1, 1, 1], [0], [0]>} : vector<1x8x8xbf16>, vector<1x8x8xbf16>, vector<1x8x8xf32> -> vector<1x8x8xf32>
    "tpu.trace_stop"() : () -> ()
    %103 = arith.addf %102, %4 : vector<1x8x8xf32>
    %cst_41 = arith.constant dense<0xFF800000> : vector<1x8xf32>
    %104 = vector.multi_reduction <maximumf>, %103, %cst_41 [2] : vector<1x8x8xf32> to vector<1x8xf32>
    %105 = vector.shape_cast %104 : vector<1x8xf32> to vector<1x8x1xf32>
    %106 = vector.broadcast %105 : vector<1x8x1xf32> to vector<1x8x8xf32>
    %107 = arith.subf %103, %106 : vector<1x8x8xf32>
    %108 = math.exp %107 : vector<1x8x8xf32>
    %cst_42 = arith.constant dense<0.000000e+00> : vector<1x8xf32>
    %109 = vector.multi_reduction <add>, %108, %cst_42 [2] : vector<1x8x8xf32> to vector<1x8xf32>
    %110 = vector.shape_cast %109 : vector<1x8xf32> to vector<1x8x1xf32>
    %111 = arith.truncf %108 : vector<1x8x8xf32> to vector<1x8x8xbf16>
    "tpu.trace_start"() <{level = 10 : i32, message = "bqk,bkd->bqd"}> : () -> ()
    %cst_43 = arith.constant dense<0.000000e+00> : vector<1x8x8xf32>
    %112 = tpu.matmul %111, %101, %cst_43 {dimension_numbers = #tpu.dot_dimension_numbers<[2], [1], [1], [2], [0, 0, 0, 1, 1, 2], [0], [0]>} : vector<1x8x8xbf16>, vector<1x8x8xbf16>, vector<1x8x8xf32> -> vector<1x8x8xf32>
    "tpu.trace_stop"() : () -> ()
    %113 = tpu.reciprocal %110 {approx = true} : vector<1x8x1xf32> -> vector<1x8x1xf32>
    %114 = vector.broadcast %113 : vector<1x8x1xf32> to vector<1x8x8xf32>
    %115 = arith.mulf %112, %114 : vector<1x8x8xf32>
    %116 = vector.shape_cast %115 : vector<1x8x8xf32> to vector<8x8xf32>
    %117 = vector.extract_strided_slice %64 {offsets = [0, 16], sizes = [8, 8], strides = [1, 1]} : vector<8x96xf32> to vector<8x8xf32>
    %cst_44 = arith.constant 0.353553385 : f32
    %118 = vector.broadcast %cst_44 : f32 to vector<8x8xf32>
    %119 = arith.mulf %117, %118 : vector<8x8xf32>
    %120 = arith.truncf %119 : vector<8x8xf32> to vector<8x8xbf16>
    %121 = vector.shape_cast %120 : vector<8x8xbf16> to vector<1x8x8xbf16>
    %122 = vector.extract_strided_slice %64 {offsets = [0, 48], sizes = [8, 8], strides = [1, 1]} : vector<8x96xf32> to vector<8x8xf32>
    %123 = arith.truncf %122 : vector<8x8xf32> to vector<8x8xbf16>
    %124 = vector.shape_cast %123 : vector<8x8xbf16> to vector<1x8x8xbf16>
    %125 = vector.extract_strided_slice %64 {offsets = [0, 80], sizes = [8, 8], strides = [1, 1]} : vector<8x96xf32> to vector<8x8xf32>
    %126 = arith.truncf %125 : vector<8x8xf32> to vector<8x8xbf16>
    %127 = vector.shape_cast %126 : vector<8x8xbf16> to vector<1x8x8xbf16>
    "tpu.trace_start"() <{level = 10 : i32, message = "bqd,bkd->bqk"}> : () -> ()
    %cst_45 = arith.constant dense<0.000000e+00> : vector<1x8x8xf32>
    %128 = tpu.matmul %121, %124, %cst_45 {dimension_numbers = #tpu.dot_dimension_numbers<[2], [2], [1], [1], [0, 0, 0, 1, 1, 1], [0], [0]>} : vector<1x8x8xbf16>, vector<1x8x8xbf16>, vector<1x8x8xf32> -> vector<1x8x8xf32>
    "tpu.trace_stop"() : () -> ()
    %129 = arith.addf %128, %4 : vector<1x8x8xf32>
    %cst_46 = arith.constant dense<0xFF800000> : vector<1x8xf32>
    %130 = vector.multi_reduction <maximumf>, %129, %cst_46 [2] : vector<1x8x8xf32> to vector<1x8xf32>
    %131 = vector.shape_cast %130 : vector<1x8xf32> to vector<1x8x1xf32>
    %132 = vector.broadcast %131 : vector<1x8x1xf32> to vector<1x8x8xf32>
    %133 = arith.subf %129, %132 : vector<1x8x8xf32>
    %134 = math.exp %133 : vector<1x8x8xf32>
    %cst_47 = arith.constant dense<0.000000e+00> : vector<1x8xf32>
    %135 = vector.multi_reduction <add>, %134, %cst_47 [2] : vector<1x8x8xf32> to vector<1x8xf32>
    %136 = vector.shape_cast %135 : vector<1x8xf32> to vector<1x8x1xf32>
    %137 = arith.truncf %134 : vector<1x8x8xf32> to vector<1x8x8xbf16>
    "tpu.trace_start"() <{level = 10 : i32, message = "bqk,bkd->bqd"}> : () -> ()
    %cst_48 = arith.constant dense<0.000000e+00> : vector<1x8x8xf32>
    %138 = tpu.matmul %137, %127, %cst_48 {dimension_numbers = #tpu.dot_dimension_numbers<[2], [1], [1], [2], [0, 0, 0, 1, 1, 2], [0], [0]>} : vector<1x8x8xbf16>, vector<1x8x8xbf16>, vector<1x8x8xf32> -> vector<1x8x8xf32>
    "tpu.trace_stop"() : () -> ()
    %139 = tpu.reciprocal %136 {approx = true} : vector<1x8x1xf32> -> vector<1x8x1xf32>
    %140 = vector.broadcast %139 : vector<1x8x1xf32> to vector<1x8x8xf32>
    %141 = arith.mulf %138, %140 : vector<1x8x8xf32>
    %142 = vector.shape_cast %141 : vector<1x8x8xf32> to vector<8x8xf32>
    %143 = vector.extract_strided_slice %64 {offsets = [0, 24], sizes = [8, 8], strides = [1, 1]} : vector<8x96xf32> to vector<8x8xf32>
    %cst_49 = arith.constant 0.353553385 : f32
    %144 = vector.broadcast %cst_49 : f32 to vector<8x8xf32>
    %145 = arith.mulf %143, %144 : vector<8x8xf32>
    %146 = arith.truncf %145 : vector<8x8xf32> to vector<8x8xbf16>
    %147 = vector.shape_cast %146 : vector<8x8xbf16> to vector<1x8x8xbf16>
    %148 = vector.extract_strided_slice %64 {offsets = [0, 56], sizes = [8, 8], strides = [1, 1]} : vector<8x96xf32> to vector<8x8xf32>
    %149 = arith.truncf %148 : vector<8x8xf32> to vector<8x8xbf16>
    %150 = vector.shape_cast %149 : vector<8x8xbf16> to vector<1x8x8xbf16>
    %151 = vector.extract_strided_slice %64 {offsets = [0, 88], sizes = [8, 8], strides = [1, 1]} : vector<8x96xf32> to vector<8x8xf32>
    %152 = arith.truncf %151 : vector<8x8xf32> to vector<8x8xbf16>
    %153 = vector.shape_cast %152 : vector<8x8xbf16> to vector<1x8x8xbf16>
    "tpu.trace_start"() <{level = 10 : i32, message = "bqd,bkd->bqk"}> : () -> ()
    %cst_50 = arith.constant dense<0.000000e+00> : vector<1x8x8xf32>
    %154 = tpu.matmul %147, %150, %cst_50 {dimension_numbers = #tpu.dot_dimension_numbers<[2], [2], [1], [1], [0, 0, 0, 1, 1, 1], [0], [0]>} : vector<1x8x8xbf16>, vector<1x8x8xbf16>, vector<1x8x8xf32> -> vector<1x8x8xf32>
    "tpu.trace_stop"() : () -> ()
    %155 = arith.addf %154, %4 : vector<1x8x8xf32>
    %cst_51 = arith.constant dense<0xFF800000> : vector<1x8xf32>
    %156 = vector.multi_reduction <maximumf>, %155, %cst_51 [2] : vector<1x8x8xf32> to vector<1x8xf32>
    %157 = vector.shape_cast %156 : vector<1x8xf32> to vector<1x8x1xf32>
    %158 = vector.broadcast %157 : vector<1x8x1xf32> to vector<1x8x8xf32>
    %159 = arith.subf %155, %158 : vector<1x8x8xf32>
    %160 = math.exp %159 : vector<1x8x8xf32>
    %cst_52 = arith.constant dense<0.000000e+00> : vector<1x8xf32>
    %161 = vector.multi_reduction <add>, %160, %cst_52 [2] : vector<1x8x8xf32> to vector<1x8xf32>
    %162 = vector.shape_cast %161 : vector<1x8xf32> to vector<1x8x1xf32>
    %163 = arith.truncf %160 : vector<1x8x8xf32> to vector<1x8x8xbf16>
    "tpu.trace_start"() <{level = 10 : i32, message = "bqk,bkd->bqd"}> : () -> ()
    %cst_53 = arith.constant dense<0.000000e+00> : vector<1x8x8xf32>
    %164 = tpu.matmul %163, %153, %cst_53 {dimension_numbers = #tpu.dot_dimension_numbers<[2], [1], [1], [2], [0, 0, 0, 1, 1, 2], [0], [0]>} : vector<1x8x8xbf16>, vector<1x8x8xbf16>, vector<1x8x8xf32> -> vector<1x8x8xf32>
    "tpu.trace_stop"() : () -> ()
    %165 = tpu.reciprocal %162 {approx = true} : vector<1x8x1xf32> -> vector<1x8x1xf32>
    %166 = vector.broadcast %165 : vector<1x8x1xf32> to vector<1x8x8xf32>
    %167 = arith.mulf %164, %166 : vector<1x8x8xf32>
    %168 = vector.shape_cast %167 : vector<1x8x8xf32> to vector<8x8xf32>
    %169 = tpu.concatenate %90, %116, %142, %168 in 1 : vector<8x8xf32>, vector<8x8xf32>, vector<8x8xf32>, vector<8x8xf32> -> vector<8x32xf32>
    %170 = arith.truncf %169 : vector<8x32xf32> to vector<8x32xbf16>
    %cst_54 = arith.constant dense<0.000000e+00> : vector<8x32xf32>
    %171 = tpu.matmul %170, %19, %cst_54 {dimension_numbers = #tpu.dot_dimension_numbers<[1], [0], [0], [1], [0, 0, 1, 1], [], []>} : vector<8x32xbf16>, vector<32x32xbf16>, vector<8x32xf32> -> vector<8x32xf32>
    %172 = vector.broadcast %22 : vector<1x32xf32> to vector<8x32xf32>
    %173 = arith.addf %171, %172 : vector<8x32xf32>
    %174 = arith.addf %3, %173 : vector<8x32xf32>
    %cst_55 = arith.constant dense<0.000000e+00> : vector<8xf32>
    %175 = vector.multi_reduction <add>, %174, %cst_55 [1] : vector<8x32xf32> to vector<8xf32>
    %176 = vector.shape_cast %175 : vector<8xf32> to vector<8x1xf32>
    %cst_56 = arith.constant 3.200000e+01 : f32
    %177 = vector.broadcast %cst_56 : f32 to vector<8x1xf32>
    %178 = arith.divf %176, %177 : vector<8x1xf32>
    %179 = vector.broadcast %178 : vector<8x1xf32> to vector<8x32xf32>
    %180 = arith.subf %174, %179 : vector<8x32xf32>
    %181 = arith.mulf %180, %180 : vector<8x32xf32>
    %cst_57 = arith.constant dense<0.000000e+00> : vector<8xf32>
    %182 = vector.multi_reduction <add>, %181, %cst_57 [1] : vector<8x32xf32> to vector<8xf32>
    %183 = vector.shape_cast %182 : vector<8xf32> to vector<8x1xf32>
    %cst_58 = arith.constant 3.100000e+01 : f32
    %184 = vector.broadcast %cst_58 : f32 to vector<8x1xf32>
    %185 = arith.divf %183, %184 : vector<8x1xf32>
    %186 = math.sqrt %185 : vector<8x1xf32>
    %cst_59 = arith.constant 9.99999997E-7 : f32
    %187 = vector.broadcast %cst_59 : f32 to vector<8x1xf32>
    %188 = arith.addf %186, %187 : vector<8x1xf32>
    %189 = vector.broadcast %188 : vector<8x1xf32> to vector<8x32xf32>
    %190 = arith.divf %180, %189 : vector<8x32xf32>
    %191 = vector.broadcast %25 : vector<1x32xf32> to vector<8x32xf32>
    %192 = arith.mulf %191, %190 : vector<8x32xf32>
    %193 = vector.broadcast %28 : vector<1x32xf32> to vector<8x32xf32>
    %194 = arith.addf %192, %193 : vector<8x32xf32>
    %195 = arith.truncf %194 : vector<8x32xf32> to vector<8x32xbf16>
    %cst_60 = arith.constant dense<0.000000e+00> : vector<8x64xf32>
    %196 = tpu.matmul %195, %31, %cst_60 {dimension_numbers = #tpu.dot_dimension_numbers<[1], [0], [0], [1], [0, 0, 1, 1], [], []>} : vector<8x32xbf16>, vector<32x64xbf16>, vector<8x64xf32> -> vector<8x64xf32>
    %197 = vector.broadcast %34 : vector<1x64xf32> to vector<8x64xf32>
    %198 = arith.addf %196, %197 : vector<8x64xf32>
    %cst_61 = arith.constant 0.000000e+00 : f32
    %199 = vector.broadcast %cst_61 : f32 to vector<8x64xf32>
    %200 = arith.maximumf %198, %199 : vector<8x64xf32>
    %201 = arith.truncf %200 : vector<8x64xf32> to vector<8x64xbf16>
    %cst_62 = arith.constant dense<0.000000e+00> : vector<8x32xf32>
    %202 = tpu.matmul %201, %37, %cst_62 {dimension_numbers = #tpu.dot_dimension_numbers<[1], [0], [0], [1], [0, 0, 1, 1], [], []>} : vector<8x64xbf16>, vector<64x32xbf16>, vector<8x32xf32> -> vector<8x32xf32>
    %203 = vector.broadcast %40 : vector<1x32xf32> to vector<8x32xf32>
    %204 = arith.addf %202, %203 : vector<8x32xf32>
    %205 = arith.addf %174, %204 : vector<8x32xf32>
    %c0_63 = arith.constant 0 : index
    %c0_64 = arith.constant 0 : index
    %206 = vector.load %arg19[%c0_63, %c0_64] : memref<8x32xf32, #tpu.memory_space<vmem>>, vector<8x32xf32>
    tpu.vector_store %arg19[%c0_63, %c0_64], %205 {strides = array<i32>} : memref<8x32xf32, #tpu.memory_space<vmem>>, vector<8x32xf32>,
    %c1_i32 = arith.constant 1 : i32
    %207 = arith.cmpi eq, %arg1, %c1_i32 : i32
    %208 = arith.extui %207 : i1 to i32
    %c0_i32_65 = arith.constant 0 : i32
    %209 = arith.cmpi ne, %208, %c0_i32_65 : i32
    scf.if %209 {
      %c0_66 = arith.constant 0 : index
      %c0_67 = arith.constant 0 : index
      %210 = vector.load %arg16[%c0_66, %c0_67] : memref<1x32xf32, #tpu.memory_space<vmem>>, vector<1x32xf32>
      %c0_68 = arith.constant 0 : index
      %c0_69 = arith.constant 0 : index
      %211 = vector.load %arg17[%c0_68, %c0_69] : memref<1x32xf32, #tpu.memory_space<vmem>>, vector<1x32xf32>
      %cst_70 = arith.constant dense<0.000000e+00> : vector<8xf32>
      %212 = vector.multi_reduction <add>, %205, %cst_70 [1] : vector<8x32xf32> to vector<8xf32>
      %213 = vector.shape_cast %212 : vector<8xf32> to vector<8x1xf32>
      %cst_71 = arith.constant 3.200000e+01 : f32
      %214 = vector.broadcast %cst_71 : f32 to vector<8x1xf32>
      %215 = arith.divf %213, %214 : vector<8x1xf32>
      %216 = vector.broadcast %215 : vector<8x1xf32> to vector<8x32xf32>
      %217 = arith.subf %205, %216 : vector<8x32xf32>
      %218 = arith.mulf %217, %217 : vector<8x32xf32>
      %cst_72 = arith.constant dense<0.000000e+00> : vector<8xf32>
      %219 = vector.multi_reduction <add>, %218, %cst_72 [1] : vector<8x32xf32> to vector<8xf32>
      %220 = vector.shape_cast %219 : vector<8xf32> to vector<8x1xf32>
      %cst_73 = arith.constant 3.100000e+01 : f32
      %221 = vector.broadcast %cst_73 : f32 to vector<8x1xf32>
      %222 = arith.divf %220, %221 : vector<8x1xf32>
      %223 = math.sqrt %222 : vector<8x1xf32>
      %cst_74 = arith.constant 9.99999997E-7 : f32
      %224 = vector.broadcast %cst_74 : f32 to vector<8x1xf32>
      %225 = arith.addf %223, %224 : vector<8x1xf32>
      %226 = vector.broadcast %225 : vector<8x1xf32> to vector<8x32xf32>
      %227 = arith.divf %217, %226 : vector<8x32xf32>
      %228 = vector.broadcast %210 : vector<1x32xf32> to vector<8x32xf32>
      %229 = arith.mulf %228, %227 : vector<8x32xf32>
      %230 = vector.broadcast %211 : vector<1x32xf32> to vector<8x32xf32>
      %231 = arith.addf %229, %230 : vector<8x32xf32>
      %c0_75 = arith.constant 0 : index
      %c0_76 = arith.constant 0 : index
      %232 = vector.load %arg18[%c0_75, %c0_76] : memref<8x32xf32, #tpu.memory_space<vmem>>, vector<8x32xf32>
      tpu.vector_store %arg18[%c0_75, %c0_76], %231 {strides = array<i32>} : memref<8x32xf32, #tpu.memory_space<vmem>>, vector<8x32xf32>,
    } else {
    }
    return
  }
  func.func @transform_0(%arg0: i32, %arg1: i32) -> (i32, i32) {
    %c0_i32 = arith.constant 0 : i32
    %c0_i32_0 = arith.constant 0 : i32
    return %arg0, %c0_i32 : i32, i32
  }
  func.func @transform_1(%arg0: i32, %arg1: i32) -> (i32, i32, i32) {
    %c0_i32 = arith.constant 0 : i32
    %c0_i32_0 = arith.constant 0 : i32
    %c0_i32_1 = arith.constant 0 : i32
    return %arg0, %c0_i32, %c0_i32_0 : i32, i32, i32
  }
  func.func @transform_2(%arg0: i32, %arg1: i32) -> (i32, i32, i32) {
    %c0_i32 = arith.constant 0 : i32
    %c0_i32_0 = arith.constant 0 : i32
    %c0_i32_1 = arith.constant 0 : i32
    %c0_i32_2 = arith.constant 0 : i32
    return %c0_i32, %c0_i32_0, %c0_i32_1 : i32, i32, i32
  }
  func.func @transform_3(%arg0: i32, %arg1: i32) -> (i32, i32, i32) {
    %c0_i32 = arith.constant 0 : i32
    %c0_i32_0 = arith.constant 0 : i32
    %c0_i32_1 = arith.constant 0 : i32
    %c0_i32_2 = arith.constant 0 : i32
    return %c0_i32, %c0_i32_0, %c0_i32_1 : i32, i32, i32
  }
  func.func @transform_4(%arg0: i32, %arg1: i32) -> (i32, i32, i32) {
    %c0_i32 = arith.constant 0 : i32
    %c0_i32_0 = arith.constant 0 : i32
    %c0_i32_1 = arith.constant 0 : i32
    %c0_i32_2 = arith.constant 0 : i32
    return %c0_i32, %c0_i32_0, %c0_i32_1 : i32, i32, i32
  }
  func.func @transform_5(%arg0: i32, %arg1: i32) -> (i32, i32, i32) {
    %c0_i32 = arith.constant 0 : i32
    %c0_i32_0 = arith.constant 0 : i32
    %c0_i32_1 = arith.constant 0 : i32
    %c0_i32_2 = arith.constant 0 : i32
    return %c0_i32, %c0_i32_0, %c0_i32_1 : i32, i32, i32
  }
  func.func @transform_6(%arg0: i32, %arg1: i32) -> (i32, i32, i32) {
    %c0_i32 = arith.constant 0 : i32
    %c0_i32_0 = arith.constant 0 : i32
    %c0_i32_1 = arith.constant 0 : i32
    %c0_i32_2 = arith.constant 0 : i32
    return %c0_i32, %c0_i32_0, %c0_i32_1 : i32, i32, i32
  }
  func.func @transform_7(%arg0: i32, %arg1: i32) -> (i32, i32, i32) {
    %c0_i32 = arith.constant 0 : i32
    %c0_i32_0 = arith.constant 0 : i32
    %c0_i32_1 = arith.constant 0 : i32
    %c0_i32_2 = arith.constant 0 : i32
    return %c0_i32, %c0_i32_0, %c0_i32_1 : i32, i32, i32
  }
  func.func @transform_8(%arg0: i32, %arg1: i32) -> (i32, i32, i32) {
    %c0_i32 = arith.constant 0 : i32
    %c0_i32_0 = arith.constant 0 : i32
    %c0_i32_1 = arith.constant 0 : i32
    %c0_i32_2 = arith.constant 0 : i32
    return %c0_i32, %c0_i32_0, %c0_i32_1 : i32, i32, i32
  }
  func.func @transform_9(%arg0: i32, %arg1: i32) -> (i32, i32, i32) {
    %c0_i32 = arith.constant 0 : i32
    %c0_i32_0 = arith.constant 0 : i32
    %c0_i32_1 = arith.constant 0 : i32
    %c0_i32_2 = arith.constant 0 : i32
    return %c0_i32, %c0_i32_0, %c0_i32_1 : i32, i32, i32
  }
  func.func @transform_10(%arg0: i32, %arg1: i32) -> (i32, i32, i32) {
    %c0_i32 = arith.constant 0 : i32
    %c0_i32_0 = arith.constant 0 : i32
    %c0_i32_1 = arith.constant 0 : i32
    %c0_i32_2 = arith.constant 0 : i32
    return %c0_i32, %c0_i32_0, %c0_i32_1 : i32, i32, i32
  }
  func.func @transform_11(%arg0: i32, %arg1: i32) -> (i32, i32, i32) {
    %c0_i32 = arith.constant 0 : i32
    %c0_i32_0 = arith.constant 0 : i32
    %c0_i32_1 = arith.constant 0 : i32
    %c0_i32_2 = arith.constant 0 : i32
    return %c0_i32, %c0_i32_0, %c0_i32_1 : i32, i32, i32
  }
  func.func @transform_12(%arg0: i32, %arg1: i32) -> (i32, i32, i32) {
    %c0_i32 = arith.constant 0 : i32
    %c0_i32_0 = arith.constant 0 : i32
    %c0_i32_1 = arith.constant 0 : i32
    %c0_i32_2 = arith.constant 0 : i32
    return %c0_i32, %c0_i32_0, %c0_i32_1 : i32, i32, i32
  }
  func.func @transform_13(%arg0: i32, %arg1: i32) -> (i32, i32, i32) {
    %c0_i32 = arith.constant 0 : i32
    %c0_i32_0 = arith.constant 0 : i32
    %c0_i32_1 = arith.constant 0 : i32
    %c0_i32_2 = arith.constant 0 : i32
    return %c0_i32, %c0_i32_0, %c0_i32_1 : i32, i32, i32
  }
  func.func @transform_14(%arg0: i32, %arg1: i32) -> (i32, i32) {
    %c0_i32 = arith.constant 0 : i32
    %c0_i32_0 = arith.constant 0 : i32
    %c0_i32_1 = arith.constant 0 : i32
    return %c0_i32, %c0_i32_0 : i32, i32
  }
  func.func @transform_15(%arg0: i32, %arg1: i32) -> (i32, i32) {
    %c0_i32 = arith.constant 0 : i32
    %c0_i32_0 = arith.constant 0 : i32
    %c0_i32_1 = arith.constant 0 : i32
    return %c0_i32, %c0_i32_0 : i32, i32
  }
  func.func @transform_16(%arg0: i32, %arg1: i32) -> (i32, i32) {
    %c0_i32 = arith.constant 0 : i32
    %c0_i32_0 = arith.constant 0 : i32
    return %arg0, %c0_i32 : i32, i32
  }
}

</mosaic_0001>

<llo_original>
// kernel: tpu_custom_call.1
$region0: #{tpu_custom_call.1}
  #allocation0 [shape = 'u32[]', space=smem, size = 0x4, offset = 0x4, fixed_abs, tag = 'smem constant byte address 0x4 - core index']
  #allocation1 [shape = 'u32[72,128]{1,0:T(1,128)}', space=vmem, size = 0x9000, scoped, tag = 'internal scratch']
  #allocation2 [shape = 'f32[8,32]{1,0:T(8,128)}', space=vmem, size = 0x1000, scoped, tag = 'scratch operand']
  %s0 = inlined_call_operand.hbm [shape: f32[16,32], index: 0, kind: input, shape index: {}]
  %s1 = inlined_call_operand.hbm [shape: f32[2,8,8], index: 1, kind: input, shape index: {}]
  %s2 = inlined_call_operand.hbm [shape: f32[2,1,32], index: 2, kind: input, shape index: {}]
  %s3 = inlined_call_operand.hbm [shape: f32[2,1,32], index: 3, kind: input, shape index: {}]
  %s4 = inlined_call_operand.vmem [shape: bf16[2,32,96], index: 4, kind: input, shape index: {}]
  %s5 = inlined_call_operand.vmem [shape: f32[2,1,96], index: 5, kind: input, shape index: {}]
  %s6 = inlined_call_operand.vmem [shape: bf16[2,32,32], index: 6, kind: input, shape index: {}]
  %s7 = inlined_call_operand.vmem [shape: f32[2,1,32], index: 7, kind: input, shape index: {}]
  %s8 = inlined_call_operand.vmem [shape: f32[2,1,32], index: 8, kind: input, shape index: {}]
  %s9 = inlined_call_operand.hbm [shape: f32[2,1,32], index: 9, kind: input, shape index: {}]
  %s10 = inlined_call_operand.vmem [shape: bf16[2,32,64], index: 10, kind: input, shape index: {}]
  %s11 = inlined_call_operand.vmem [shape: f32[2,1,64], index: 11, kind: input, shape index: {}]
  %s12 = inlined_call_operand.vmem [shape: bf16[2,64,32], index: 12, kind: input, shape index: {}]
  %s13 = inlined_call_operand.vmem [shape: f32[2,1,32], index: 13, kind: input, shape index: {}]
  %s14 = inlined_call_operand.vmem [shape: f32[1,32], index: 14, kind: input, shape index: {}]
  %s15 = inlined_call_operand.vmem [shape: f32[1,32], index: 15, kind: input, shape index: {}]
  %s16 = inlined_call_operand.hbm [shape: f32[16,32], index: 16, kind: output, shape index: {}]
  %s17 = sld [smem:[#allocation0]]
  $region125: #{tpu_custom_call.1} parent=0
    _
  %s19 = ssub.s32 1, %s17
  %s20 = scalar_select 0, %s19, %s17
  $region1: #{tpu_custom_call.1} parent=0
    #allocation3 [shape = 'u8[8192]{0}', space=vmem, size = 0x2000, scoped, tag = 'input window, operand 0']
    #allocation4 [shape = 's32[2]{0}', space=sflag, size = 0x8, scoped, tag = 'scoped memory for tpu_custom_call.1']
    #allocation5 [shape = 's32[2]{0}', space=sflag, size = 0x8, scoped, tag = 'scoped memory for tpu_custom_call.1']
    #allocation6 [shape = 'u8[8192]{0}', space=vmem, size = 0x2000, scoped, tag = 'input window, operand 1']
    #allocation7 [shape = 's32[2]{0}', space=sflag, size = 0x8, scoped, tag = 'scoped memory for tpu_custom_call.1']
    #allocation8 [shape = 'u8[1024]{0}', space=vmem, size = 0x400, scoped, tag = 'input window, operand 2, single buffered']
    #allocation9 [shape = 'u8[1024]{0}', space=vmem, size = 0x400, scoped, tag = 'input window, operand 3, single buffered']
    #allocation10 [shape = 's32[1]{0}', space=sflag, size = 0x4, scoped, tag = 'scoped memory for tpu_custom_call.1']
    #allocation11 [shape = 'u8[1024]{0}', space=vmem, size = 0x400, scoped, tag = 'input window, operand 9, single buffered']
    #allocation12 [shape = 'u8[8192]{0}', space=vmem, size = 0x2000, scoped, tag = 'output window, operand 0']
    %21 = vsyncpa [#allocation4], 0
    %s22 = scalar_lea.sflag [#allocation4], 1
    %23 = vsyncpa %s22, 0
    %24 = vsyncpa [#allocation7], 0
    %s25 = scalar_lea.sflag [#allocation7], 1
    %26 = vsyncpa %s25, 0
    %27 = vsyncpa [#allocation10], 0
    %28 = vsyncpa [#allocation5], 0
    %s29 = scalar_lea.sflag [#allocation5], 1
    %30 = vsyncpa %s29, 0
    loop: start=0, step=1, limit=6
    $region2: #{tpu_custom_call.1} parent=1 // loop_pre_header
      _
    $region3: #{tpu_custom_call.1} parent=1 // loop_header
      %s32 = sphi 0, %s36
      %p33 = scmp.ge.s32.totalorder %s32, 6
      %s39 = sphi 0, %s51
      %s40 = sphi 0, %s47
      %s41 = sphi 0, %s39
      %s42 = sphi 0, %s40
      %s43 = sphi 0, %s41
      %s44 = sphi 0, %s42
      %s54 = sphi 0, %s56
      %s57 = sphi 0, %s54
      %s58 = sphi 0, %s57
      %s74 = sphi 0, %s58
      %s80 = sphi 0, %s82
      %s83 = sphi 0, %s80
      %s84 = sphi 0, %s83
      %s100 = sphi 0, %s84
      %s104 = sphi 0, %s104
      %s106 = sphi 0, %s104
      %s107 = sphi 0, %s106
      %s121 = sphi 0, %s107
      %s125 = sphi 0, %s125
      %s127 = sphi 0, %s125
      %s128 = sphi 0, %s127
      %s142 = sphi 0, %s128
      %s146 = sphi 0, %s146
      %s148 = sphi 0, %s146
      %s149 = sphi 0, %s148
      %s163 = sphi 0, %s149
      %s167 = sphi 0, %s167
      %s169 = sphi 0, %s167
      %s170 = sphi 0, %s169
      %s184 = sphi 0, %s170
      %s188 = sphi 0, %s188
      %s190 = sphi 0, %s188
      %s191 = sphi 0, %s190
      %s205 = sphi 0, %s191
      %s209 = sphi 0, %s209
      %s211 = sphi 0, %s209
      %s212 = sphi 0, %s211
      %s226 = sphi 0, %s212
      %s230 = sphi 0, %s230
      %s232 = sphi 0, %s230
      %s233 = sphi 0, %s232
      %s247 = sphi 0, %s233
      %s251 = sphi 0, %s251
      %s253 = sphi 0, %s251
      %s254 = sphi 0, %s253
      %s268 = sphi 0, %s254
      %s272 = sphi 0, %s272
      %s274 = sphi 0, %s272
      %s275 = sphi 0, %s274
      %s289 = sphi 0, %s275
      %s293 = sphi 0, %s293
      %s295 = sphi 0, %s293
      %s296 = sphi 0, %s295
      %s310 = sphi 0, %s296
      %s314 = sphi 0, %s314
      %s316 = sphi 0, %s314
      %s317 = sphi 0, %s316
      %s331 = sphi 0, %s317
      %s335 = sphi 0, %s335
      %s337 = sphi 0, %s335
      %s338 = sphi 0, %s337
      %s352 = sphi 0, %s338
      %s356 = sphi 0, %s356
      %s358 = sphi 0, %s356
      %s359 = sphi 0, %s358
      %s373 = sphi 0, %s359
      %s377 = sphi 0, %s377
      %s379 = sphi 0, %s377
      %s380 = sphi 0, %s379
      %s394 = sphi 0, %s380
      %s400 = sphi 0, %s402
      %s403 = sphi 0, %s400
      %s404 = sphi 0, %s403
      %s420 = sphi 0, %s404
    $region4: #{tpu_custom_call.1} parent=1 // loop_header_branch
      %35 = sbr.rel (%p33) target = $region8
    $region5: #{tpu_custom_call.1} parent=1 // loop_body
      %s37 = ssub.s32 %s32, 1
      %s38 = ssub.s32 %s32, 2
      %s45 = sadd.s32 1, %s40
      %p46 = scmp.ge.s32.totalorder %s45, 2
      %s47 = scalar_select %p46, 0, %s45
      %s48 = sadd.s32 1, %s39
      %s49 = scalar_select %p46, %s48, %s39
      %p50 = scmp.ge.s32.totalorder %s49, 2
      %s51 = scalar_select %p50, 0, %s49
      %s52 = ssub.s32 %s39, %s51
      %p53 = scmp.eq.s32.totalorder %s52, 0
      %s55 = sadd.s32 %s54, 1
      %s56 = scalar_select %p53, %s54, %s55
      %p59 = pneg %p53
      %p60 = scmp.eq.s32.totalorder %s32, 3
      %p61 = por %p59, %p60
      %p62 = scmp.ne.s32.totalorder %s54, %s57
      %p63 = scmp.eq.s32.totalorder %s32, 0
      %p64 = por %p62, %p63
      %p65 = scmp.ne.s32.totalorder %s54, %s57
      %p66 = scmp.eq.s32.totalorder %s37, 3
      %p67 = por %p65, %p66
      %p68 = scmp.ne.s32.totalorder %s57, %s58
      %p69 = scmp.eq.s32.totalorder %s37, 0
      %p70 = por %p68, %p69
      %p71 = scmp.ne.s32.totalorder %s57, %s58
      %p72 = scmp.eq.s32.totalorder %s38, 3
      %p73 = por %p71, %p72
      %p75 = scmp.ne.s32.totalorder %s58, %s74
      %p76 = scmp.eq.s32.totalorder %s38, 0
      %p77 = por %p75, %p76
      %s78 = ssub.s32 %s39, %s51
      %p79 = scmp.eq.s32.totalorder %s78, 0
      %s81 = sadd.s32 %s80, 1
      %s82 = scalar_select %p79, %s80, %s81
      %p85 = pneg %p79
      %p86 = scmp.eq.s32.totalorder %s32, 3
      %p87 = por %p85, %p86
      %p88 = scmp.ne.s32.totalorder %s80, %s83
      %p89 = scmp.eq.s32.totalorder %s32, 0
      %p90 = por %p88, %p89
      %p91 = scmp.ne.s32.totalorder %s80, %s83
      %p92 = scmp.eq.s32.totalorder %s37, 3
      %p93 = por %p91, %p92
      %p94 = scmp.ne.s32.totalorder %s83, %s84
      %p95 = scmp.eq.s32.totalorder %s37, 0
      %p96 = por %p94, %p95
      %p97 = scmp.ne.s32.totalorder %s83, %s84
      %p98 = scmp.eq.s32.totalorder %s38, 3
      %p99 = por %p97, %p98
      %p101 = scmp.ne.s32.totalorder %s84, %s100
      %p102 = scmp.eq.s32.totalorder %s38, 0
      %p103 = por %p101, %p102
      %s105 = sadd.s32 %s104, 1
      %p108 = scmp.eq.s32.totalorder %s32, 3
      %p109 = scmp.ne.s32.totalorder %s104, %s106
      %p110 = scmp.eq.s32.totalorder %s32, 0
      %p111 = por %p109, %p110
      %p112 = scmp.ne.s32.totalorder %s104, %s106
      %p113 = scmp.eq.s32.totalorder %s37, 3
      %p114 = por %p112, %p113
      %p115 = scmp.ne.s32.totalorder %s106, %s107
      %p116 = scmp.eq.s32.totalorder %s37, 0
      %p117 = por %p115, %p116
      %p118 = scmp.ne.s32.totalorder %s106, %s107
      %p119 = scmp.eq.s32.totalorder %s38, 3
      %p120 = por %p118, %p119
      %p122 = scmp.ne.s32.totalorder %s107, %s121
      %p123 = scmp.eq.s32.totalorder %s38, 0
      %p124 = por %p122, %p123
      %s126 = sadd.s32 %s125, 1
      %p129 = scmp.eq.s32.totalorder %s32, 3
      %p130 = scmp.ne.s32.totalorder %s125, %s127
      %p131 = scmp.eq.s32.totalorder %s32, 0
      %p132 = por %p130, %p131
      %p133 = scmp.ne.s32.totalorder %s125, %s127
      %p134 = scmp.eq.s32.totalorder %s37, 3
      %p135 = por %p133, %p134
      %p136 = scmp.ne.s32.totalorder %s127, %s128
      %p137 = scmp.eq.s32.totalorder %s37, 0
      %p138 = por %p136, %p137
      %p139 = scmp.ne.s32.totalorder %s127, %s128
      %p140 = scmp.eq.s32.totalorder %s38, 3
      %p141 = por %p139, %p140
      %p143 = scmp.ne.s32.totalorder %s128, %s142
      %p144 = scmp.eq.s32.totalorder %s38, 0
      %p145 = por %p143, %p144
      %s147 = sadd.s32 %s146, 1
      %p150 = scmp.eq.s32.totalorder %s32, 3
      %p151 = scmp.ne.s32.totalorder %s146, %s148
      %p152 = scmp.eq.s32.totalorder %s32, 0
      %p153 = por %p151, %p152
      %p154 = scmp.ne.s32.totalorder %s146, %s148
      %p155 = scmp.eq.s32.totalorder %s37, 3
      %p156 = por %p154, %p155
      %p157 = scmp.ne.s32.totalorder %s148, %s149
      %p158 = scmp.eq.s32.totalorder %s37, 0
      %p159 = por %p157, %p158
      %p160 = scmp.ne.s32.totalorder %s148, %s149
      %p161 = scmp.eq.s32.totalorder %s38, 3
      %p162 = por %p160, %p161
      %p164 = scmp.ne.s32.totalorder %s149, %s163
      %p165 = scmp.eq.s32.totalorder %s38, 0
      %p166 = por %p164, %p165
      %s168 = sadd.s32 %s167, 1
      %p171 = scmp.eq.s32.totalorder %s32, 3
      %p172 = scmp.ne.s32.totalorder %s167, %s169
      %p173 = scmp.eq.s32.totalorder %s32, 0
      %p174 = por %p172, %p173
      %p175 = scmp.ne.s32.totalorder %s167, %s169
      %p176 = scmp.eq.s32.totalorder %s37, 3
      %p177 = por %p175, %p176
      %p178 = scmp.ne.s32.totalorder %s169, %s170
      %p179 = scmp.eq.s32.totalorder %s37, 0
      %p180 = por %p178, %p179
      %p181 = scmp.ne.s32.totalorder %s169, %s170
      %p182 = scmp.eq.s32.totalorder %s38, 3
      %p183 = por %p181, %p182
      %p185 = scmp.ne.s32.totalorder %s170, %s184
      %p186 = scmp.eq.s32.totalorder %s38, 0
      %p187 = por %p185, %p186
      %s189 = sadd.s32 %s188, 1
      %p192 = scmp.eq.s32.totalorder %s32, 3
      %p193 = scmp.ne.s32.totalorder %s188, %s190
      %p194 = scmp.eq.s32.totalorder %s32, 0
      %p195 = por %p193, %p194
      %p196 = scmp.ne.s32.totalorder %s188, %s190
      %p197 = scmp.eq.s32.totalorder %s37, 3
      %p198 = por %p196, %p197
      %p199 = scmp.ne.s32.totalorder %s190, %s191
      %p200 = scmp.eq.s32.totalorder %s37, 0
      %p201 = por %p199, %p200
      %p202 = scmp.ne.s32.totalorder %s190, %s191
      %p203 = scmp.eq.s32.totalorder %s38, 3
      %p204 = por %p202, %p203
      %p206 = scmp.ne.s32.totalorder %s191, %s205
      %p207 = scmp.eq.s32.totalorder %s38, 0
      %p208 = por %p206, %p207
      %s210 = sadd.s32 %s209, 1
      %p213 = scmp.eq.s32.totalorder %s32, 3
      %p214 = scmp.ne.s32.totalorder %s209, %s211
      %p215 = scmp.eq.s32.totalorder %s32, 0
      %p216 = por %p214, %p215
      %p217 = scmp.ne.s32.totalorder %s209, %s211
      %p218 = scmp.eq.s32.totalorder %s37, 3
      %p219 = por %p217, %p218
      %p220 = scmp.ne.s32.totalorder %s211, %s212
      %p221 = scmp.eq.s32.totalorder %s37, 0
      %p222 = por %p220, %p221
      %p223 = scmp.ne.s32.totalorder %s211, %s212
      %p224 = scmp.eq.s32.totalorder %s38, 3
      %p225 = por %p223, %p224
      %p227 = scmp.ne.s32.totalorder %s212, %s226
      %p228 = scmp.eq.s32.totalorder %s38, 0
      %p229 = por %p227, %p228
      %s231 = sadd.s32 %s230, 1
      %p234 = scmp.eq.s32.totalorder %s32, 3
      %p235 = scmp.ne.s32.totalorder %s230, %s232
      %p236 = scmp.eq.s32.totalorder %s32, 0
      %p237 = por %p235, %p236
      %p238 = scmp.ne.s32.totalorder %s230, %s232
      %p239 = scmp.eq.s32.totalorder %s37, 3
      %p240 = por %p238, %p239
      %p241 = scmp.ne.s32.totalorder %s232, %s233
      %p242 = scmp.eq.s32.totalorder %s37, 0
      %p243 = por %p241, %p242
      %p244 = scmp.ne.s32.totalorder %s232, %s233
      %p245 = scmp.eq.s32.totalorder %s38, 3
      %p246 = por %p244, %p245
      %p248 = scmp.ne.s32.totalorder %s233, %s247
      %p249 = scmp.eq.s32.totalorder %s38, 0
      %p250 = por %p248, %p249
      %s252 = sadd.s32 %s251, 1
      %p255 = scmp.eq.s32.totalorder %s32, 3
      %p256 = scmp.ne.s32.totalorder %s251, %s253
      %p257 = scmp.eq.s32.totalorder %s32, 0
      %p258 = por %p256, %p257
      %p259 = scmp.ne.s32.totalorder %s251, %s253
      %p260 = scmp.eq.s32.totalorder %s37, 3
      %p261 = por %p259, %p260
      %p262 = scmp.ne.s32.totalorder %s253, %s254
      %p263 = scmp.eq.s32.totalorder %s37, 0
      %p264 = por %p262, %p263
      %p265 = scmp.ne.s32.totalorder %s253, %s254
      %p266 = scmp.eq.s32.totalorder %s38, 3
      %p267 = por %p265, %p266
      %p269 = scmp.ne.s32.totalorder %s254, %s268
      %p270 = scmp.eq.s32.totalorder %s38, 0
      %p271 = por %p269, %p270
      %s273 = sadd.s32 %s272, 1
      %p276 = scmp.eq.s32.totalorder %s32, 3
      %p277 = scmp.ne.s32.totalorder %s272, %s274
      %p278 = scmp.eq.s32.totalorder %s32, 0
      %p279 = por %p277, %p278
      %p280 = scmp.ne.s32.totalorder %s272, %s274
      %p281 = scmp.eq.s32.totalorder %s37, 3
      %p282 = por %p280, %p281
      %p283 = scmp.ne.s32.totalorder %s274, %s275
      %p284 = scmp.eq.s32.totalorder %s37, 0
      %p285 = por %p283, %p284
      %p286 = scmp.ne.s32.totalorder %s274, %s275
      %p287 = scmp.eq.s32.totalorder %s38, 3
      %p288 = por %p286, %p287
      %p290 = scmp.ne.s32.totalorder %s275, %s289
      %p291 = scmp.eq.s32.totalorder %s38, 0
      %p292 = por %p290, %p291
      %s294 = sadd.s32 %s293, 1
      %p297 = scmp.eq.s32.totalorder %s32, 3
      %p298 = scmp.ne.s32.totalorder %s293, %s295
      %p299 = scmp.eq.s32.totalorder %s32, 0
      %p300 = por %p298, %p299
      %p301 = scmp.ne.s32.totalorder %s293, %s295
      %p302 = scmp.eq.s32.totalorder %s37, 3
      %p303 = por %p301, %p302
      %p304 = scmp.ne.s32.totalorder %s295, %s296
      %p305 = scmp.eq.s32.totalorder %s37, 0
      %p306 = por %p304, %p305
      %p307 = scmp.ne.s32.totalorder %s295, %s296
      %p308 = scmp.eq.s32.totalorder %s38, 3
      %p309 = por %p307, %p308
      %p311 = scmp.ne.s32.totalorder %s296, %s310
      %p312 = scmp.eq.s32.totalorder %s38, 0
      %p313 = por %p311, %p312
      %s315 = sadd.s32 %s314, 1
      %p318 = scmp.eq.s32.totalorder %s32, 3
      %p319 = scmp.ne.s32.totalorder %s314, %s316
      %p320 = scmp.eq.s32.totalorder %s32, 0
      %p321 = por %p319, %p320
      %p322 = scmp.ne.s32.totalorder %s314, %s316
      %p323 = scmp.eq.s32.totalorder %s37, 3
      %p324 = por %p322, %p323
      %p325 = scmp.ne.s32.totalorder %s316, %s317
      %p326 = scmp.eq.s32.totalorder %s37, 0
      %p327 = por %p325, %p326
      %p328 = scmp.ne.s32.totalorder %s316, %s317
      %p329 = scmp.eq.s32.totalorder %s38, 3
      %p330 = por %p328, %p329
      %p332 = scmp.ne.s32.totalorder %s317, %s331
      %p333 = scmp.eq.s32.totalorder %s38, 0
      %p334 = por %p332, %p333
      %s336 = sadd.s32 %s335, 1
      %p339 = scmp.eq.s32.totalorder %s32, 3
      %p340 = scmp.ne.s32.totalorder %s335, %s337
      %p341 = scmp.eq.s32.totalorder %s32, 0
      %p342 = por %p340, %p341
      %p343 = scmp.ne.s32.totalorder %s335, %s337
      %p344 = scmp.eq.s32.totalorder %s37, 3
      %p345 = por %p343, %p344
      %p346 = scmp.ne.s32.totalorder %s337, %s338
      %p347 = scmp.eq.s32.totalorder %s37, 0
      %p348 = por %p346, %p347
      %p349 = scmp.ne.s32.totalorder %s337, %s338
      %p350 = scmp.eq.s32.totalorder %s38, 3
      %p351 = por %p349, %p350
      %p353 = scmp.ne.s32.totalorder %s338, %s352
      %p354 = scmp.eq.s32.totalorder %s38, 0
      %p355 = por %p353, %p354
      %s357 = sadd.s32 %s356, 1
      %p360 = scmp.eq.s32.totalorder %s32, 3
      %p361 = scmp.ne.s32.totalorder %s356, %s358
      %p362 = scmp.eq.s32.totalorder %s32, 0
      %p363 = por %p361, %p362
      %p364 = scmp.ne.s32.totalorder %s356, %s358
      %p365 = scmp.eq.s32.totalorder %s37, 3
      %p366 = por %p364, %p365
      %p367 = scmp.ne.s32.totalorder %s358, %s359
      %p368 = scmp.eq.s32.totalorder %s37, 0
      %p369 = por %p367, %p368
      %p370 = scmp.ne.s32.totalorder %s358, %s359
      %p371 = scmp.eq.s32.totalorder %s38, 3
      %p372 = por %p370, %p371
      %p374 = scmp.ne.s32.totalorder %s359, %s373
      %p375 = scmp.eq.s32.totalorder %s38, 0
      %p376 = por %p374, %p375
      %s378 = sadd.s32 %s377, 1
      %p381 = scmp.eq.s32.totalorder %s32, 3
      %p382 = scmp.ne.s32.totalorder %s377, %s379
      %p383 = scmp.eq.s32.totalorder %s32, 0
      %p384 = por %p382, %p383
      %p385 = scmp.ne.s32.totalorder %s377, %s379
      %p386 = scmp.eq.s32.totalorder %s37, 3
      %p387 = por %p385, %p386
      %p388 = scmp.ne.s32.totalorder %s379, %s380
      %p389 = scmp.eq.s32.totalorder %s37, 0
      %p390 = por %p388, %p389
      %p391 = scmp.ne.s32.totalorder %s379, %s380
      %p392 = scmp.eq.s32.totalorder %s38, 3
      %p393 = por %p391, %p392
      %p395 = scmp.ne.s32.totalorder %s380, %s394
      %p396 = scmp.eq.s32.totalorder %s38, 0
      %p397 = por %p395, %p396
      %s398 = ssub.s32 %s39, %s51
      %p399 = scmp.eq.s32.totalorder %s398, 0
      %s401 = sadd.s32 %s400, 1
      %s402 = scalar_select %p399, %s400, %s401
      %p405 = pneg %p399
      %p406 = scmp.eq.s32.totalorder %s32, 3
      %p407 = por %p405, %p406
      %p408 = scmp.ne.s32.totalorder %s400, %s403
      %p409 = scmp.eq.s32.totalorder %s32, 0
      %p410 = por %p408, %p409
      %p411 = scmp.ne.s32.totalorder %s400, %s403
      %p412 = scmp.eq.s32.totalorder %s37, 3
      %p413 = por %p411, %p412
      %p414 = scmp.ne.s32.totalorder %s403, %s404
      %p415 = scmp.eq.s32.totalorder %s37, 0
      %p416 = por %p414, %p415
      %p417 = scmp.ne.s32.totalorder %s403, %s404
      %p418 = scmp.eq.s32.totalorder %s38, 3
      %p419 = por %p417, %p418
      %p421 = scmp.ne.s32.totalorder %s404, %s420
      %p422 = scmp.eq.s32.totalorder %s38, 0
      %p423 = por %p421, %p422
      %p424 = scmp.le.s32.totalorder 1, %s32
      %p425 = scmp.lt.s32.totalorder %s32, 5
      %p426 = pnand %p424, %p425
      %p427 = pneg %p426
      // Predicated region
      $region9: #{tpu_custom_call.1} parent=5 // pred_check
        _
      $region10: #{tpu_custom_call.1} parent=5 // pred_check_branch
        %429 = sbr.rel (%p426) target = $region12
      $region11: #{tpu_custom_call.1} parent=5 // pred_region
        %s430 = ssub.s32 %s32, 1
        // Predicated region
        $region13: #{tpu_custom_call.1} parent=11 // pred_check
          %p431 = pneg %p117
        $region14: #{tpu_custom_call.1} parent=11 // pred_check_branch
          %433 = sbr.rel (%p431) target = $region16
        $region15: #{tpu_custom_call.1} parent=11 // pred_region
          %435 = vsyncadd [#allocation7], 0
          %s436 = sshll.u32 %s2, 4
          %s437 = int_to_ptr.hbm [resolvable:$true] %s436
          %s438 = sshll.u32 [#allocation8], 4
          %s439 = int_to_ptr.vmem [resolvable:$true] %s438
          %444 = dma.hbm_to_vmem [thread:$0]  %s437, 32, %s439, [#allocation7], 16, 16, 1
        $region16: #{tpu_custom_call.1} parent=11 // pred_fallthru
          _
        // Predicated region
        $region17: #{tpu_custom_call.1} parent=11 // pred_check
          %p445 = pneg %p138
        $region18: #{tpu_custom_call.1} parent=11 // pred_check_branch
          %447 = sbr.rel (%p445) target = $region20
        $region19: #{tpu_custom_call.1} parent=11 // pred_region
          %449 = vsyncadd [#allocation10], 0
          %s450 = sshll.u32 %s3, 4
          %s451 = int_to_ptr.hbm [resolvable:$true] %s450
          %s452 = sshll.u32 [#allocation9], 4
          %s453 = int_to_ptr.vmem [resolvable:$true] %s452
          %458 = dma.hbm_to_vmem [thread:$0]  %s451, 32, %s453, [#allocation10], 16, 16, 1
        $region20: #{tpu_custom_call.1} parent=11 // pred_fallthru
          _
        // Predicated region
        $region21: #{tpu_custom_call.1} parent=11 // pred_check
          %p459 = pneg %p159
        $region22: #{tpu_custom_call.1} parent=11 // pred_check_branch
          %461 = sbr.rel (%p459) target = $region24
        $region23: #{tpu_custom_call.1} parent=11 // pred_region
          _
        $region24: #{tpu_custom_call.1} parent=11 // pred_fallthru
          _
        // Predicated region
        $region25: #{tpu_custom_call.1} parent=11 // pred_check
          %p462 = pneg %p180
        $region26: #{tpu_custom_call.1} parent=11 // pred_check_branch
          %464 = sbr.rel (%p462) target = $region28
        $region27: #{tpu_custom_call.1} parent=11 // pred_region
          _
        $region28: #{tpu_custom_call.1} parent=11 // pred_fallthru
          _
        // Predicated region
        $region29: #{tpu_custom_call.1} parent=11 // pred_check
          %p465 = pneg %p201
        $region30: #{tpu_custom_call.1} parent=11 // pred_check_branch
          %467 = sbr.rel (%p465) target = $region32
        $region31: #{tpu_custom_call.1} parent=11 // pred_region
          _
        $region32: #{tpu_custom_call.1} parent=11 // pred_fallthru
          _
        // Predicated region
        $region33: #{tpu_custom_call.1} parent=11 // pred_check
          %p468 = pneg %p222
        $region34: #{tpu_custom_call.1} parent=11 // pred_check_branch
          %470 = sbr.rel (%p468) target = $region36
        $region35: #{tpu_custom_call.1} parent=11 // pred_region
          _
        $region36: #{tpu_custom_call.1} parent=11 // pred_fallthru
          _
        // Predicated region
        $region37: #{tpu_custom_call.1} parent=11 // pred_check
          %p471 = pneg %p243
        $region38: #{tpu_custom_call.1} parent=11 // pred_check_branch
          %473 = sbr.rel (%p471) target = $region40
        $region39: #{tpu_custom_call.1} parent=11 // pred_region
          _
        $region40: #{tpu_custom_call.1} parent=11 // pred_fallthru
          _
        // Predicated region
        $region41: #{tpu_custom_call.1} parent=11 // pred_check
          %p474 = pneg %p264
        $region42: #{tpu_custom_call.1} parent=11 // pred_check_branch
          %476 = sbr.rel (%p474) target = $region44
        $region43: #{tpu_custom_call.1} parent=11 // pred_region
          %478 = vsyncadd [#allocation10], 0
          %s479 = sshll.u32 %s9, 4
          %s480 = int_to_ptr.hbm [resolvable:$true] %s479
          %s481 = sshll.u32 [#allocation11], 4
          %s482 = int_to_ptr.vmem [resolvable:$true] %s481
          %487 = dma.hbm_to_vmem [thread:$0]  %s480, 32, %s482, [#allocation10], 16, 16, 1
        $region44: #{tpu_custom_call.1} parent=11 // pred_fallthru
          _
        // Predicated region
        $region45: #{tpu_custom_call.1} parent=11 // pred_check
          %p488 = pneg %p285
        $region46: #{tpu_custom_call.1} parent=11 // pred_check_branch
          %490 = sbr.rel (%p488) target = $region48
        $region47: #{tpu_custom_call.1} parent=11 // pred_region
          _
        $region48: #{tpu_custom_call.1} parent=11 // pred_fallthru
          _
        // Predicated region
        $region49: #{tpu_custom_call.1} parent=11 // pred_check
          %p491 = pneg %p306
        $region50: #{tpu_custom_call.1} parent=11 // pred_check_branch
          %493 = sbr.rel (%p491) target = $region52
        $region51: #{tpu_custom_call.1} parent=11 // pred_region
          _
        $region52: #{tpu_custom_call.1} parent=11 // pred_fallthru
          _
        // Predicated region
        $region53: #{tpu_custom_call.1} parent=11 // pred_check
          %p494 = pneg %p327
        $region54: #{tpu_custom_call.1} parent=11 // pred_check_branch
          %496 = sbr.rel (%p494) target = $region56
        $region55: #{tpu_custom_call.1} parent=11 // pred_region
          _
        $region56: #{tpu_custom_call.1} parent=11 // pred_fallthru
          _
        // Predicated region
        $region57: #{tpu_custom_call.1} parent=11 // pred_check
          %p497 = pneg %p348
        $region58: #{tpu_custom_call.1} parent=11 // pred_check_branch
          %499 = sbr.rel (%p497) target = $region60
        $region59: #{tpu_custom_call.1} parent=11 // pred_region
          _
        $region60: #{tpu_custom_call.1} parent=11 // pred_fallthru
          _
        // Predicated region
        $region61: #{tpu_custom_call.1} parent=11 // pred_check
          %p500 = pneg %p369
        $region62: #{tpu_custom_call.1} parent=11 // pred_check_branch
          %502 = sbr.rel (%p500) target = $region64
        $region63: #{tpu_custom_call.1} parent=11 // pred_region
          _
        $region64: #{tpu_custom_call.1} parent=11 // pred_fallthru
          _
        // Predicated region
        $region65: #{tpu_custom_call.1} parent=11 // pred_check
          %p503 = pneg %p390
        $region66: #{tpu_custom_call.1} parent=11 // pred_check_branch
          %505 = sbr.rel (%p503) target = $region68
        $region67: #{tpu_custom_call.1} parent=11 // pred_region
          _
        $region68: #{tpu_custom_call.1} parent=11 // pred_fallthru
          _
      $region12: #{tpu_custom_call.1} parent=5 // pred_fallthru
        _
      %p506 = scmp.lt.s32.totalorder %s32, 4
      // Predicated region
      $region69: #{tpu_custom_call.1} parent=5 // pred_check
        %p507 = pneg %p506
      $region70: #{tpu_custom_call.1} parent=5 // pred_check_branch
        %509 = sbr.rel (%p507) target = $region72
      $region71: #{tpu_custom_call.1} parent=5 // pred_region
        // Predicated region
        $region73: #{tpu_custom_call.1} parent=71 // pred_check
          %p510 = pneg %p64
        $region74: #{tpu_custom_call.1} parent=71 // pred_check_branch
          %512 = sbr.rel (%p510) target = $region76
        $region75: #{tpu_custom_call.1} parent=71 // pred_region
          %s513 = sand.u32 %s54, 1
          %s514 = scalar_lea.sflag [#allocation4], %s513
          %s515 = sand.u32 %s54, 1
          %s516 = smul.addr %s515, 8
          %s517 = scalar_lea.vmem [#allocation3], %s516
          %519 = vsyncadd %s514, 0
          %s520 = smul.addr %s39, 8
          %s521 = scalar_lea.hbm %s0, %s520
          %s523 = sshll.u32 %s521, 4
          %s524 = int_to_ptr.hbm [resolvable:$true] %s523
          %s525 = sshll.u32 %s517, 4
          %s526 = int_to_ptr.vmem [resolvable:$true] %s525
          %528 = dma.hbm_to_vmem [thread:$0]  %s524, 128, %s526, %s514
        $region76: #{tpu_custom_call.1} parent=71 // pred_fallthru
          _
        // Predicated region
        $region77: #{tpu_custom_call.1} parent=71 // pred_check
          %p529 = pneg %p90
        $region78: #{tpu_custom_call.1} parent=71 // pred_check_branch
          %531 = sbr.rel (%p529) target = $region80
        $region79: #{tpu_custom_call.1} parent=71 // pred_region
          %s532 = sand.u32 %s32, 1
          %s533 = scalar_lea.sflag [#allocation7], %s532
          %s534 = sand.u32 %s80, 1
          %s535 = smul.addr %s534, 8
          %s536 = scalar_lea.vmem [#allocation6], %s535
          %538 = vsyncadd %s533, 0
          %s539 = smul.addr %s39, 8
          %s540 = scalar_lea.hbm %s1, %s539
          %s542 = sshll.u32 %s540, 4
          %s543 = int_to_ptr.hbm [resolvable:$true] %s542
          %s544 = sshll.u32 %s536, 4
          %s545 = int_to_ptr.vmem [resolvable:$true] %s544
          %547 = dma.hbm_to_vmem [thread:$0]  %s543, 128, %s545, %s533
        $region80: #{tpu_custom_call.1} parent=71 // pred_fallthru
          _
      $region72: #{tpu_custom_call.1} parent=5 // pred_fallthru
        _
      %p548 = scmp.le.s32.totalorder 1, %s32
      %p549 = scmp.lt.s32.totalorder %s32, 5
      %p550 = pnand %p548, %p549
      %p551 = pneg %p550
      // Predicated region
      $region81: #{tpu_custom_call.1} parent=5 // pred_check
        _
      $region82: #{tpu_custom_call.1} parent=5 // pred_check_branch
        %553 = sbr.rel (%p550) target = $region84
      $region83: #{tpu_custom_call.1} parent=5 // pred_region
        %s554 = ssub.s32 %s32, 1
        %s555 = sand.u32 %s57, 1
        %s556 = scalar_lea.sflag [#allocation4], %s555
        %s557 = sand.u32 %s57, 1
        %s558 = smul.addr %s557, 8
        %s559 = scalar_lea.vmem [#allocation3], %s558
        // Predicated region
        $region85: #{tpu_custom_call.1} parent=83 // pred_check
          %p560 = pneg %p70
        $region86: #{tpu_custom_call.1} parent=83 // pred_check_branch
          %562 = sbr.rel (%p560) target = $region88
        $region87: #{tpu_custom_call.1} parent=83 // pred_region
          %564 = dma.done %s556, 128
        $region88: #{tpu_custom_call.1} parent=83 // pred_fallthru
          _
        %s565 = sand.u32 %s37, 1
        %s566 = scalar_lea.sflag [#allocation7], %s565
        %s567 = sand.u32 %s83, 1
        %s568 = smul.addr %s567, 8
        %s569 = scalar_lea.vmem [#allocation6], %s568
        // Predicated region
        $region89: #{tpu_custom_call.1} parent=83 // pred_check
          %p570 = pneg %p96
        $region90: #{tpu_custom_call.1} parent=83 // pred_check_branch
          %572 = sbr.rel (%p570) target = $region92
        $region91: #{tpu_custom_call.1} parent=83 // pred_region
          %574 = dma.done %s566, 128
        $region92: #{tpu_custom_call.1} parent=83 // pred_fallthru
          _
        // Predicated region
        $region93: #{tpu_custom_call.1} parent=83 // pred_check
          %p575 = pneg %p117
        $region94: #{tpu_custom_call.1} parent=83 // pred_check_branch
          %577 = sbr.rel (%p575) target = $region96
        $region95: #{tpu_custom_call.1} parent=83 // pred_region
          %579 = dma.done [#allocation7], 32
        $region96: #{tpu_custom_call.1} parent=83 // pred_fallthru
          _
        // Predicated region
        $region97: #{tpu_custom_call.1} parent=83 // pred_check
          %p580 = pneg %p138
        $region98: #{tpu_custom_call.1} parent=83 // pred_check_branch
          %582 = sbr.rel (%p580) target = $region100
        $region99: #{tpu_custom_call.1} parent=83 // pred_region
          %584 = dma.done [#allocation10], 32
        $region100: #{tpu_custom_call.1} parent=83 // pred_fallthru
          _
        // Predicated region
        $region101: #{tpu_custom_call.1} parent=83 // pred_check
          %p585 = pneg %p264
        $region102: #{tpu_custom_call.1} parent=83 // pred_check_branch
          %587 = sbr.rel (%p585) target = $region104
        $region103: #{tpu_custom_call.1} parent=83 // pred_region
          %589 = dma.done [#allocation10], 32
        $region104: #{tpu_custom_call.1} parent=83 // pred_fallthru
          _
        %s590 = sand.u32 %s57, 1
        %s591 = scalar_lea.sflag [#allocation4], %s590
        %s592 = sand.u32 %s57, 1
        %s593 = smul.addr %s592, 8
        %s594 = scalar_lea.vmem [#allocation3], %s593
        %p595 = pneg %p70
        %p596 = pneg %p67
        %s597 = sand.u32 %s37, 1
        %s598 = scalar_lea.sflag [#allocation7], %s597
        %s599 = sand.u32 %s83, 1
        %s600 = smul.addr %s599, 8
        %s601 = scalar_lea.vmem [#allocation6], %s600
        %p602 = pneg %p96
        %p603 = pneg %p93
        %p604 = pneg %p117
        %p605 = pneg %p114
        %p606 = pneg %p138
        %p607 = pneg %p135
        %p608 = pneg %p159
        %p609 = pneg %p156
        %p610 = pneg %p180
        %p611 = pneg %p177
        %p612 = pneg %p201
        %p613 = pneg %p198
        %p614 = pneg %p222
        %p615 = pneg %p219
        %p616 = pneg %p243
        %p617 = pneg %p240
        %p618 = pneg %p264
        %p619 = pneg %p261
        %p620 = pneg %p285
        %p621 = pneg %p282
        %p622 = pneg %p306
        %p623 = pneg %p303
        %p624 = pneg %p327
        %p625 = pneg %p324
        %p626 = pneg %p348
        %p627 = pneg %p345
        %p628 = pneg %p369
        %p629 = pneg %p366
        %p630 = pneg %p390
        %p631 = pneg %p387
        %p632 = pneg %p416
        %p633 = pneg %p413
        %s634 = sand.u32 %s403, 1
        %s635 = scalar_lea.sflag [#allocation5], %s634
        %s636 = sand.u32 %s403, 1
        %s637 = smul.addr %s636, 8
        %s638 = scalar_lea.vmem [#allocation12], %s637
        %p640 = scmp.eq.s32.totalorder %s42, 0
        // Predicated region
        $region105: #{tpu_custom_call.1} parent=83 // pred_check
          %p641 = pneg %p640
        $region106: #{tpu_custom_call.1} parent=83 // pred_check_branch
          %643 = sbr.rel (%p641) target = $region108
        $region107: #{tpu_custom_call.1} parent=83 // pred_region
          %v644 = vld [vmem:[%s559] sm:$0xff]
          %vm645 = vcmask 261120
          %646 = vst.msk [vmem:[#allocation2] sm:$0xff] %vm645, %v644
        $region108: #{tpu_custom_call.1} parent=83 // pred_fallthru
          _
        %v647 = vld [vmem:[#allocation2] sm:$0xff]
        %v648 = vld [vmem:[%s569] sm:$0xff]
        %s649 = scalar_lea.vmem [#allocation8], %s42
        %v650 = vld [vmem:[%s649] sm:$0x1]
        %s651 = scalar_lea.vmem [#allocation9], %s42
        %v652 = vld [vmem:[%s651] sm:$0x1]
        %s653 = smul.u32 %s42, 4
        %s654 = smul.addr %s653, 4
        %s655 = scalar_lea.vmem %s4, %s654
        %v656 = vld [vmem:[%s655] sm:$0xf]
        %v657 = vld [vmem:[%s655 + $0x4] sm:$0xf]
        %v658 = vld [vmem:[%s655 + $0x8] sm:$0xf]
        %v659 = vld [vmem:[%s655 + $0xc] sm:$0xf]
        %s660 = scalar_lea.vmem %s5, %s42
        %v661 = vld [vmem:[%s660] sm:$0x1]
        %s662 = smul.addr %s653, 4
        %s663 = scalar_lea.vmem %s6, %s662
        %v664 = vld [vmem:[%s663] sm:$0xf]
        %v665 = vld [vmem:[%s663 + $0x4] sm:$0xf]
        %v666 = vld [vmem:[%s663 + $0x8] sm:$0xf]
        %v667 = vld [vmem:[%s663 + $0xc] sm:$0xf]
        %s668 = scalar_lea.vmem %s7, %s42
        %v669 = vld [vmem:[%s668] sm:$0x1]
        %s670 = scalar_lea.vmem %s8, %s42
        %v671 = vld [vmem:[%s670] sm:$0x1]
        %s672 = scalar_lea.vmem [#allocation11], %s42
        %v673 = vld [vmem:[%s672] sm:$0x1]
        %s674 = smul.addr %s653, 4
        %s675 = scalar_lea.vmem %s10, %s674
        %v676 = vld [vmem:[%s675] sm:$0xf]
        %v677 = vld [vmem:[%s675 + $0x4] sm:$0xf]
        %v678 = vld [vmem:[%s675 + $0x8] sm:$0xf]
        %v679 = vld [vmem:[%s675 + $0xc] sm:$0xf]
        %s680 = scalar_lea.vmem %s11, %s42
        %v681 = vld [vmem:[%s680] sm:$0x1]
        %s682 = smul.u32 %s42, 8
        %s683 = smul.addr %s682, 4
        %s684 = scalar_lea.vmem %s12, %s683
        %v685 = vld [vmem:[%s684] sm:$0xf]
        %v686 = vld [vmem:[%s684 + $0x4] sm:$0xf]
        %v687 = vld [vmem:[%s684 + $0x8] sm:$0xf]
        %v688 = vld [vmem:[%s684 + $0xc] sm:$0xf]
        %v689 = vld [vmem:[%s684 + $0x10] sm:$0xf]
        %v690 = vld [vmem:[%s684 + $0x14] sm:$0xf]
        %v691 = vld [vmem:[%s684 + $0x18] sm:$0xf]
        %v692 = vld [vmem:[%s684 + $0x1c] sm:$0xf]
        %s693 = scalar_lea.vmem %s13, %s42
        %v694 = vld [vmem:[%s693] sm:$0x1]
        %vm695 = vcmask 261120
        %v696 = vsel %vm695, %v647, 0.0
        %697 = vadd.xlane.f32.xlu0 %v696
        %v698 = vpop.xlane.xlu0 %697
        %v699 = vrcp.pop 32.0
        %v700 = vmul.f32 32.0, %v699
        %v701 = vsub.f32 1.0, %v700
        %v702 = vmul.f32 %v699, %v701
        %v703 = vadd.f32 %v699, %v702
        %vm704 = vweird.f32 %v699
        %v705 = vsel %vm704, %v699, %v703
        %v706 = vmul.f32 %v698, %v705
        %v707 = vsub.f32 %v647, %v706
        %v708 = vmul.f32 %v707, %v707
        %v709 = vsel %vm695, %v708, 0.0
        %710 = vadd.xlane.f32.xlu0 %v709
        %v711 = vpop.xlane.xlu0 %710
        %v712 = vrcp.pop 31.0
        %v713 = vmul.f32 31.0, %v712
        %v714 = vsub.f32 1.0, %v713
        %v715 = vmul.f32 %v712, %v714
        %v716 = vadd.f32 %v712, %v715
        %vm717 = vweird.f32 %v712
        %v718 = vsel %vm717, %v712, %v716
        %v719 = vmul.f32 %v711, %v718
        %v720 = vrsqrt.pop %v719
        %v721 = vmul.f32 %v720, %v719
        %v722 = vmul.f32 %v721, %v720
        %v723 = vmul.f32 0.5, %v722
        %v724 = vsub.f32 1.5, %v723
        %v725 = vmul.f32 %v720, %v724
        %v726 = vmul.f32 %v719, %v725
        %vm727 = vcmp.eq.f32.partialorder %v719, inf
        %v728 = vsel %vm727, %v719, %v726
        %vm729 = vcmp.eq.f32.partialorder %v719, 0.0
        %v730 = vand.u32 %v719, 2147483648
        %v731 = vsel %vm729, %v730, %v728
        %v732 = vadd.f32 %v731, 1e-06
        %v733 = vrcp.pop %v732
        %v734 = vmul.f32 %v732, %v733
        %v735 = vsub.f32 1.0, %v734
        %v736 = vmul.f32 %v733, %v735
        %v737 = vadd.f32 %v733, %v736
        %vm738 = vweird.f32 %v732
        %vm739 = vweird.f32 %v733
        %vm740 = vmor %vm738, %vm739
        %v741 = vsel %vm740, %v733, %v737
        %v742 = vand.u32 2147483647, %v732
        %vm743 = vcmp.eq.f32.partialorder %v742, 8.507059e+37
        %v744 = vand.u32 %v732, 2147483648
        %v745 = vor.u32 1.1754944e-38, %v744
        %v746 = vsel %vm743, %v745, %v741
        %v747 = vmul.f32 %v707, %v746
        %v749 = vperm.slane %v650, 0
        %v751 = vmul.f32 %v749, %v747
        %v753 = vperm.slane %v652, 0
        %v755 = vadd.f32 %v751, %v753
        %v756 = vpack.c.bf16 %v755, %v755
        %v758 = vperm.slane %v661, 0
        %v764 = vunpack.c.l.b16 %v656
        %v765 = vunpack.c.l.b16 %v657
        %v766 = vunpack.c.l.b16 %v658
        %v767 = vunpack.c.l.b16 %v659
        %v768 = vpack.c.b16 %v765, %v764
        %v769 = vpack.c.b16 %v767, %v766
        %v773 = vsel %vm695, %v756, 0
        %775 = vmatpush.bf16.msra.mxu0 0
        %776 = vmatpush.bf16.msra.mxu0 0
        %777 = vmatpush.bf16.msra.mxu0 0
        %778 = vmatpush.bf16.msra.mxu0 0
        %779 = vmatpush.bf16.msra.mxu0 0
        %780 = vmatpush.bf16.msra.mxu0 0
        %781 = vmatpush.bf16.msra.mxu0 %v769
        %782 = vmatpush.bf16.msra.mxu0 %v768
        %783 = vmatmul.bf16.gmra.mxu0 %v773
        %v784 = vpop.f32.mrf.mxu0
        %v785 = vadd.f32 %v758, %v784
        %v786 = vpop.f32.mrf.mxu0
        %787 = vdwg.mxu0
        %v788 = vmul.f32 %v785, 0.35355338
        %v789 = vpack.c.bf16 %v788, %v788
        %v790 = vpack.c.bf16 %v785, %v785
        %v792 = vunpack.c.l.b16 %v790
        %v793 = vpack.c.b16 %v792, %v792
        %794 = vrot.lane.b32.xlu0 %v793, 96
        %v795 = vpop.permute.xlu0 %794
        %vm796 = vcmask 64512
        %v798 = vsel %vm796, %v789, 0
        %v801 = vsel %vm796, %v795, 0
        %803 = vmatpush.bf16.xpose.msra.mxu0 0
        %804 = vmatpush.bf16.xpose.msra.mxu0 0
        %805 = vmatpush.bf16.xpose.msra.mxu0 0
        %806 = vmatpush.bf16.xpose.msra.mxu0 0
        %807 = vmatpush.bf16.xpose.msra.mxu0 0
        %808 = vmatpush.bf16.xpose.msra.mxu0 0
        %809 = vmatpush.bf16.xpose.msra.mxu0 0
        %810 = vmatpush.bf16.xpose.msra.mxu0 %v801
        %811 = vmatmul.bf16.gmra.mxu0 %v798
        %v812 = vpop.f32.mrf.mxu0
        %v813 = vadd.f32 %v648, %v812
        %v814 = vpop.f32.mrf.mxu0
        %815 = vdwg.mxu0
        %v816 = vsel %vm796, %v813, -inf
        %817 = vmax.xlane.f32.xlu0 %v816
        %v818 = vpop.xlane.xlu0 %817
        %v819 = vsub.f32 %v813, %v818
        %v820 = vmul.f32 %v819, 1.442695
        %v821 = vpow.pop %v820
        %v822 = vsel %vm796, %v821, 0.0
        %823 = vadd.xlane.f32.xlu0 %v822
        %v824 = vpop.xlane.xlu0 %823
        %v825 = vpack.c.bf16 %v821, %v821
        %826 = vrot.lane.b32.xlu0 %v793, 64
        %v827 = vpop.permute.xlu0 %826
        %v829 = vsel %vm796, %v825, 0
        %vm831 = vcmask 1043456
        %v833 = vsel %vm831, %v827, 0
        %835 = vmatpush.bf16.msra.mxu0 0
        %836 = vmatpush.bf16.msra.mxu0 0
        %837 = vmatpush.bf16.msra.mxu0 0
        %838 = vmatpush.bf16.msra.mxu0 0
        %839 = vmatpush.bf16.msra.mxu0 0
        %840 = vmatpush.bf16.msra.mxu0 0
        %841 = vmatpush.bf16.msra.mxu0 0
        %842 = vmatpush.bf16.msra.mxu0 %v833
        %843 = vmatmul.bf16.gmra.mxu0 %v829
        %v844 = vpop.f32.mrf.mxu0
        %v845 = vadd.f32 0.0, %v844
        %v846 = vpop.f32.mrf.mxu0
        %847 = vdwg.mxu0
        %v848 = vrcp.pop %v824
        %v849 = vmul.f32 %v845, %v848
        %v851 = vunpack.c.l.b16 %v789
        %v852 = vpack.c.b16 %v851, %v851
        %853 = vrot.lane.b32.xlu0 %v852, 120
        %v854 = vpop.permute.xlu0 %853
        %855 = vrot.lane.b32.xlu0 %v793, 88
        %v856 = vpop.permute.xlu0 %855
        %v858 = vsel %vm796, %v854, 0
        %v861 = vsel %vm796, %v856, 0
        %863 = vmatpush.bf16.xpose.msra.mxu0 0
        %864 = vmatpush.bf16.xpose.msra.mxu0 0
        %865 = vmatpush.bf16.xpose.msra.mxu0 0
        %866 = vmatpush.bf16.xpose.msra.mxu0 0
        %867 = vmatpush.bf16.xpose.msra.mxu0 0
        %868 = vmatpush.bf16.xpose.msra.mxu0 0
        %869 = vmatpush.bf16.xpose.msra.mxu0 0
        %870 = vmatpush.bf16.xpose.msra.mxu0 %v861
        %871 = vmatmul.bf16.gmra.mxu0 %v858
        %v872 = vpop.f32.mrf.mxu0
        %v873 = vadd.f32 %v648, %v872
        %v874 = vpop.f32.mrf.mxu0
        %875 = vdwg.mxu0
        %v876 = vsel %vm796, %v873, -inf
        %877 = vmax.xlane.f32.xlu0 %v876
        %v878 = vpop.xlane.xlu0 %877
        %v879 = vsub.f32 %v873, %v878
        %v880 = vmul.f32 %v879, 1.442695
        %v881 = vpow.pop %v880
        %v882 = vsel %vm796, %v881, 0.0
        %883 = vadd.xlane.f32.xlu0 %v882
        %v884 = vpop.xlane.xlu0 %883
        %v885 = vpack.c.bf16 %v881, %v881
        %886 = vrot.lane.b32.xlu0 %v793, 56
        %v887 = vpop.permute.xlu0 %886
        %v889 = vsel %vm796, %v885, 0
        %v892 = vsel %vm831, %v887, 0
        %894 = vmatpush.bf16.msra.mxu0 0
        %895 = vmatpush.bf16.msra.mxu0 0
        %896 = vmatpush.bf16.msra.mxu0 0
        %897 = vmatpush.bf16.msra.mxu0 0
        %898 = vmatpush.bf16.msra.mxu0 0
        %899 = vmatpush.bf16.msra.mxu0 0
        %900 = vmatpush.bf16.msra.mxu0 0
        %901 = vmatpush.bf16.msra.mxu0 %v892
        %902 = vmatmul.bf16.gmra.mxu0 %v889
        %v903 = vpop.f32.mrf.mxu0
        %v904 = vadd.f32 0.0, %v903
        %v905 = vpop.f32.mrf.mxu0
        %906 = vdwg.mxu0
        %v907 = vrcp.pop %v884
        %v908 = vmul.f32 %v904, %v907
        %909 = vrot.lane.b32.xlu0 %v852, 112
        %v910 = vpop.permute.xlu0 %909
        %911 = vrot.lane.b32.xlu0 %v793, 80
        %v912 = vpop.permute.xlu0 %911
        %v914 = vsel %vm796, %v910, 0
        %v917 = vsel %vm796, %v912, 0
        %919 = vmatpush.bf16.xpose.msra.mxu0 0
        %920 = vmatpush.bf16.xpose.msra.mxu0 0
        %921 = vmatpush.bf16.xpose.msra.mxu0 0
        %922 = vmatpush.bf16.xpose.msra.mxu0 0
        %923 = vmatpush.bf16.xpose.msra.mxu0 0
        %924 = vmatpush.bf16.xpose.msra.mxu0 0
        %925 = vmatpush.bf16.xpose.msra.mxu0 0
        %926 = vmatpush.bf16.xpose.msra.mxu0 %v917
        %927 = vmatmul.bf16.gmra.mxu0 %v914
        %v928 = vpop.f32.mrf.mxu0
        %v929 = vadd.f32 %v648, %v928
        %v930 = vpop.f32.mrf.mxu0
        %931 = vdwg.mxu0
        %v932 = vsel %vm796, %v929, -inf
        %933 = vmax.xlane.f32.xlu0 %v932
        %v934 = vpop.xlane.xlu0 %933
        %v935 = vsub.f32 %v929, %v934
        %v936 = vmul.f32 %v935, 1.442695
        %v937 = vpow.pop %v936
        %v938 = vsel %vm796, %v937, 0.0
        %939 = vadd.xlane.f32.xlu0 %v938
        %v940 = vpop.xlane.xlu0 %939
        %v941 = vpack.c.bf16 %v937, %v937
        %942 = vrot.lane.b32.xlu0 %v793, 48
        %v943 = vpop.permute.xlu0 %942
        %v945 = vsel %vm796, %v941, 0
        %v948 = vsel %vm831, %v943, 0
        %950 = vmatpush.bf16.msra.mxu0 0
        %951 = vmatpush.bf16.msra.mxu0 0
        %952 = vmatpush.bf16.msra.mxu0 0
        %953 = vmatpush.bf16.msra.mxu0 0
        %954 = vmatpush.bf16.msra.mxu0 0
        %955 = vmatpush.bf16.msra.mxu0 0
        %956 = vmatpush.bf16.msra.mxu0 0
        %957 = vmatpush.bf16.msra.mxu0 %v948
        %958 = vmatmul.bf16.gmra.mxu0 %v945
        %v959 = vpop.f32.mrf.mxu0
        %v960 = vadd.f32 0.0, %v959
        %v961 = vpop.f32.mrf.mxu0
        %962 = vdwg.mxu0
        %v963 = vrcp.pop %v940
        %v964 = vmul.f32 %v960, %v963
        %965 = vrot.lane.b32.xlu0 %v852, 104
        %v966 = vpop.permute.xlu0 %965
        %967 = vrot.lane.b32.xlu0 %v793, 72
        %v968 = vpop.permute.xlu0 %967
        %v970 = vsel %vm796, %v966, 0
        %v973 = vsel %vm796, %v968, 0
        %975 = vmatpush.bf16.xpose.msra.mxu0 0
        %976 = vmatpush.bf16.xpose.msra.mxu0 0
        %977 = vmatpush.bf16.xpose.msra.mxu0 0
        %978 = vmatpush.bf16.xpose.msra.mxu0 0
        %979 = vmatpush.bf16.xpose.msra.mxu0 0
        %980 = vmatpush.bf16.xpose.msra.mxu0 0
        %981 = vmatpush.bf16.xpose.msra.mxu0 0
        %982 = vmatpush.bf16.xpose.msra.mxu0 %v973
        %983 = vmatmul.bf16.gmra.mxu0 %v970
        %v984 = vpop.f32.mrf.mxu0
        %v985 = vadd.f32 %v648, %v984
        %v986 = vpop.f32.mrf.mxu0
        %987 = vdwg.mxu0
        %v988 = vsel %vm796, %v985, -inf
        %989 = vmax.xlane.f32.xlu0 %v988
        %v990 = vpop.xlane.xlu0 %989
        %v991 = vsub.f32 %v985, %v990
        %v992 = vmul.f32 %v991, 1.442695
        %v993 = vpow.pop %v992
        %v994 = vsel %vm796, %v993, 0.0
        %995 = vadd.xlane.f32.xlu0 %v994
        %v996 = vpop.xlane.xlu0 %995
        %v997 = vpack.c.bf16 %v993, %v993
        %998 = vrot.lane.b32.xlu0 %v793, 40
        %v999 = vpop.permute.xlu0 %998
        %v1001 = vsel %vm796, %v997, 0
        %v1004 = vsel %vm831, %v999, 0
        %1006 = vmatpush.bf16.msra.mxu0 0
        %1007 = vmatpush.bf16.msra.mxu0 0
        %1008 = vmatpush.bf16.msra.mxu0 0
        %1009 = vmatpush.bf16.msra.mxu0 0
        %1010 = vmatpush.bf16.msra.mxu0 0
        %1011 = vmatpush.bf16.msra.mxu0 0
        %1012 = vmatpush.bf16.msra.mxu0 0
        %1013 = vmatpush.bf16.msra.mxu0 %v1004
        %1014 = vmatmul.bf16.gmra.mxu0 %v1001
        %v1015 = vpop.f32.mrf.mxu0
        %v1016 = vadd.f32 0.0, %v1015
        %v1017 = vpop.f32.mrf.mxu0
        %1018 = vdwg.mxu0
        %v1019 = vrcp.pop %v996
        %v1020 = vmul.f32 %v1016, %v1019
        %1022 = vrot.lane.b32.xlu0 %v908, 8
        %v1023 = vpop.permute.xlu0 %1022
        %1026 = vrot.lane.b32.xlu0 %v964, 16
        %v1027 = vpop.permute.xlu0 %1026
        %1030 = vrot.lane.b32.xlu0 %v1020, 24
        %v1031 = vpop.permute.xlu0 %1030
        %v1033 = vsel %vm796, %v849, %v1023
        %vm1034 = vcmask 130048
        %v1035 = vsel %vm1034, %v1033, %v1027
        %vm1036 = vcmask 195584
        %v1037 = vsel %vm1036, %v1035, %v1031
        %v1038 = vpack.c.bf16 %v1037, %v1037
        %v1040 = vperm.slane %v669, 0
        %v1046 = vunpack.c.l.b16 %v664
        %v1047 = vunpack.c.l.b16 %v665
        %v1048 = vunpack.c.l.b16 %v666
        %v1049 = vunpack.c.l.b16 %v667
        %v1050 = vpack.c.b16 %v1047, %v1046
        %v1051 = vpack.c.b16 %v1049, %v1048
        %v1055 = vsel %vm695, %v1038, 0
        %1057 = vmatpush.bf16.msra.mxu0 0
        %1058 = vmatpush.bf16.msra.mxu0 0
        %1059 = vmatpush.bf16.msra.mxu0 0
        %1060 = vmatpush.bf16.msra.mxu0 0
        %1061 = vmatpush.bf16.msra.mxu0 0
        %1062 = vmatpush.bf16.msra.mxu0 0
        %1063 = vmatpush.bf16.msra.mxu0 %v1051
        %1064 = vmatpush.bf16.msra.mxu0 %v1050
        %1065 = vmatmul.bf16.gmra.mxu0 %v1055
        %v1066 = vpop.f32.mrf.mxu0
        %v1067 = vadd.f32 %v1040, %v1066
        %v1068 = vpop.f32.mrf.mxu0
        %1069 = vdwg.mxu0
        %v1070 = vadd.f32 %v647, %v1067
        %v1071 = vsel %vm695, %v1070, 0.0
        %1072 = vadd.xlane.f32.xlu0 %v1071
        %v1073 = vpop.xlane.xlu0 %1072
        %v1074 = vmul.f32 %v1073, %v705
        %v1075 = vsub.f32 %v1070, %v1074
        %v1076 = vmul.f32 %v1075, %v1075
        %v1077 = vsel %vm695, %v1076, 0.0
        %1078 = vadd.xlane.f32.xlu0 %v1077
        %v1079 = vpop.xlane.xlu0 %1078
        %v1080 = vmul.f32 %v1079, %v718
        %v1081 = vrsqrt.pop %v1080
        %v1082 = vmul.f32 %v1081, %v1080
        %v1083 = vmul.f32 %v1082, %v1081
        %v1084 = vmul.f32 0.5, %v1083
        %v1085 = vsub.f32 1.5, %v1084
        %v1086 = vmul.f32 %v1081, %v1085
        %v1087 = vmul.f32 %v1080, %v1086
        %vm1088 = vcmp.eq.f32.partialorder %v1080, inf
        %v1089 = vsel %vm1088, %v1080, %v1087
        %vm1090 = vcmp.eq.f32.partialorder %v1080, 0.0
        %v1091 = vand.u32 %v1080, 2147483648
        %v1092 = vsel %vm1090, %v1091, %v1089
        %v1093 = vadd.f32 %v1092, 1e-06
        %v1094 = vrcp.pop %v1093
        %v1095 = vmul.f32 %v1093, %v1094
        %v1096 = vsub.f32 1.0, %v1095
        %v1097 = vmul.f32 %v1094, %v1096
        %v1098 = vadd.f32 %v1094, %v1097
        %vm1099 = vweird.f32 %v1093
        %vm1100 = vweird.f32 %v1094
        %vm1101 = vmor %vm1099, %vm1100
        %v1102 = vsel %vm1101, %v1094, %v1098
        %v1103 = vand.u32 2147483647, %v1093
        %vm1104 = vcmp.eq.f32.partialorder %v1103, 8.507059e+37
        %v1105 = vand.u32 %v1093, 2147483648
        %v1106 = vor.u32 1.1754944e-38, %v1105
        %v1107 = vsel %vm1104, %v1106, %v1102
        %v1108 = vmul.f32 %v1075, %v1107
        %v1110 = vperm.slane %v671, 0
        %v1112 = vmul.f32 %v1110, %v1108
        %v1114 = vperm.slane %v673, 0
        %v1116 = vadd.f32 %v1112, %v1114
        %v1117 = vpack.c.bf16 %v1116, %v1116
        %v1119 = vperm.slane %v681, 0
        %v1125 = vunpack.c.l.b16 %v676
        %v1126 = vunpack.c.l.b16 %v677
        %v1127 = vunpack.c.l.b16 %v678
        %v1128 = vunpack.c.l.b16 %v679
        %v1129 = vpack.c.b16 %v1126, %v1125
        %v1130 = vpack.c.b16 %v1128, %v1127
        %v1134 = vsel %vm695, %v1117, 0
        %1136 = vmatpush.bf16.msra.mxu0 0
        %1137 = vmatpush.bf16.msra.mxu0 0
        %1138 = vmatpush.bf16.msra.mxu0 0
        %1139 = vmatpush.bf16.msra.mxu0 0
        %1140 = vmatpush.bf16.msra.mxu0 0
        %1141 = vmatpush.bf16.msra.mxu0 0
        %1142 = vmatpush.bf16.msra.mxu0 %v1130
        %1143 = vmatpush.bf16.msra.mxu0 %v1129
        %1144 = vmatmul.bf16.gmra.mxu0 %v1134
        %v1145 = vpop.f32.mrf.mxu0
        %v1146 = vadd.f32 %v1119, %v1145
        %v1147 = vpop.f32.mrf.mxu0
        %1148 = vdwg.mxu0
        %v1149 = vmax.f32 %v1146, 0.0
        %v1150 = vpack.c.bf16 %v1149, %v1149
        %v1152 = vperm.slane %v694, 0
        %v1162 = vunpack.c.l.b16 %v685
        %v1163 = vunpack.c.l.b16 %v686
        %v1164 = vunpack.c.l.b16 %v687
        %v1165 = vunpack.c.l.b16 %v688
        %v1166 = vunpack.c.l.b16 %v689
        %v1167 = vunpack.c.l.b16 %v690
        %v1168 = vunpack.c.l.b16 %v691
        %v1169 = vunpack.c.l.b16 %v692
        %v1170 = vpack.c.b16 %v1163, %v1162
        %v1171 = vpack.c.b16 %v1165, %v1164
        %v1172 = vpack.c.b16 %v1167, %v1166
        %v1173 = vpack.c.b16 %v1169, %v1168
        %vm1178 = vcmask 523264
        %v1180 = vsel %vm1178, %v1150, 0
        %1182 = vmatpush.bf16.msra.mxu0 0
        %1183 = vmatpush.bf16.msra.mxu0 0
        %1184 = vmatpush.bf16.msra.mxu0 0
        %1185 = vmatpush.bf16.msra.mxu0 0
        %1186 = vmatpush.bf16.msra.mxu0 %v1173
        %1187 = vmatpush.bf16.msra.mxu0 %v1172
        %1188 = vmatpush.bf16.msra.mxu0 %v1171
        %1189 = vmatpush.bf16.msra.mxu0 %v1170
        %1190 = vmatmul.bf16.gmra.mxu0 %v1180
        %v1191 = vpop.f32.mrf.mxu0
        %v1192 = vadd.f32 %v1152, %v1191
        %v1193 = vpop.f32.mrf.mxu0
        %1194 = vdwg.mxu0
        %v1195 = vadd.f32 %v1070, %v1192
        %1196 = vst.msk [vmem:[#allocation2] sm:$0xff] %vm695, %v1195
        %p1197 = scmp.eq.s32.totalorder %s42, 1
        // Predicated region
        $region109: #{tpu_custom_call.1} parent=83 // pred_check
          %p1198 = pneg %p1197
        $region110: #{tpu_custom_call.1} parent=83 // pred_check_branch
          %1200 = sbr.rel (%p1198) target = $region112
        $region111: #{tpu_custom_call.1} parent=83 // pred_region
          %v1201 = vld [vmem:[%s14] sm:$0x1]
          %v1202 = vld [vmem:[%s15] sm:$0x1]
          %v1203 = vsel %vm695, %v1195, 0.0
          %1204 = vadd.xlane.f32.xlu0 %v1203
          %v1205 = vpop.xlane.xlu0 %1204
          %v1206 = vmul.f32 %v1205, %v705
          %v1207 = vsub.f32 %v1195, %v1206
          %v1208 = vmul.f32 %v1207, %v1207
          %v1209 = vsel %vm695, %v1208, 0.0
          %1210 = vadd.xlane.f32.xlu0 %v1209
          %v1211 = vpop.xlane.xlu0 %1210
          %v1212 = vmul.f32 %v1211, %v718
          %v1213 = vrsqrt.pop %v1212
          %v1214 = vmul.f32 %v1213, %v1212
          %v1215 = vmul.f32 %v1214, %v1213
          %v1216 = vmul.f32 0.5, %v1215
          %v1217 = vsub.f32 1.5, %v1216
          %v1218 = vmul.f32 %v1213, %v1217
          %v1219 = vmul.f32 %v1212, %v1218
          %vm1220 = vcmp.eq.f32.partialorder %v1212, inf
          %v1221 = vsel %vm1220, %v1212, %v1219
          %vm1222 = vcmp.eq.f32.partialorder %v1212, 0.0
          %v1223 = vand.u32 %v1212, 2147483648
          %v1224 = vsel %vm1222, %v1223, %v1221
          %v1225 = vadd.f32 %v1224, 1e-06
          %v1226 = vrcp.pop %v1225
          %v1227 = vmul.f32 %v1225, %v1226
          %v1228 = vsub.f32 1.0, %v1227
          %v1229 = vmul.f32 %v1226, %v1228
          %v1230 = vadd.f32 %v1226, %v1229
          %vm1231 = vweird.f32 %v1225
          %vm1232 = vweird.f32 %v1226
          %vm1233 = vmor %vm1231, %vm1232
          %v1234 = vsel %vm1233, %v1226, %v1230
          %v1235 = vand.u32 2147483647, %v1225
          %vm1236 = vcmp.eq.f32.partialorder %v1235, 8.507059e+37
          %v1237 = vand.u32 %v1225, 2147483648
          %v1238 = vor.u32 1.1754944e-38, %v1237
          %v1239 = vsel %vm1236, %v1238, %v1234
          %v1240 = vmul.f32 %v1207, %v1239
          %v1242 = vperm.slane %v1201, 0
          %v1244 = vmul.f32 %v1242, %v1240
          %v1246 = vperm.slane %v1202, 0
          %v1248 = vadd.f32 %v1244, %v1246
          %1249 = vst.msk [vmem:[%s638] sm:$0xff] %vm695, %v1248
        $region112: #{tpu_custom_call.1} parent=83 // pred_fallthru
          _
        %s1250 = sand.u32 %s403, 1
        %s1251 = scalar_lea.sflag [#allocation5], %s1250
        %s1252 = sand.u32 %s403, 1
        %s1253 = smul.addr %s1252, 8
        %s1254 = scalar_lea.vmem [#allocation12], %s1253
        // Predicated region
        $region113: #{tpu_custom_call.1} parent=83 // pred_check
          %p1255 = pneg %p413
        $region114: #{tpu_custom_call.1} parent=83 // pred_check_branch
          %1257 = sbr.rel (%p1255) target = $region116
        $region115: #{tpu_custom_call.1} parent=83 // pred_region
          %1259 = vsyncadd %s1251, 0
          %s1260 = smul.addr %s41, 8
          %s1261 = scalar_lea.hbm %s16, %s1260
          %s1263 = sshll.u32 %s1254, 4
          %s1264 = int_to_ptr.vmem [resolvable:$true] %s1263
          %s1265 = sshll.u32 %s1261, 4
          %s1266 = int_to_ptr.hbm [resolvable:$true] %s1265
          %1268 = dma.vmem_to_hbm [thread:$0]  %s1264, 128, %s1266, %s1251
        $region116: #{tpu_custom_call.1} parent=83 // pred_fallthru
          _
      $region84: #{tpu_custom_call.1} parent=5 // pred_fallthru
        _
      %p1269 = scmp.le.s32.totalorder 2, %s32
      // Predicated region
      $region117: #{tpu_custom_call.1} parent=5 // pred_check
        %p1270 = pneg %p1269
      $region118: #{tpu_custom_call.1} parent=5 // pred_check_branch
        %1272 = sbr.rel (%p1270) target = $region120
      $region119: #{tpu_custom_call.1} parent=5 // pred_region
        %s1273 = ssub.s32 %s32, 2
        // Predicated region
        $region121: #{tpu_custom_call.1} parent=119 // pred_check
          %p1274 = pneg %p419
        $region122: #{tpu_custom_call.1} parent=119 // pred_check_branch
          %1276 = sbr.rel (%p1274) target = $region124
        $region123: #{tpu_custom_call.1} parent=119 // pred_region
          %s1277 = sand.u32 %s404, 1
          %s1278 = scalar_lea.sflag [#allocation5], %s1277
          %s1279 = sand.u32 %s404, 1
          %s1280 = smul.addr %s1279, 8
          %s1281 = scalar_lea.vmem [#allocation12], %s1280
          %1283 = dma.done %s1278, 128
        $region124: #{tpu_custom_call.1} parent=119 // pred_fallthru
          _
      $region120: #{tpu_custom_call.1} parent=5 // pred_fallthru
        _
    $region6: #{tpu_custom_call.1} parent=1 // loop_footer
      %s36 = sadd.s32 1, %s32
    $region7: #{tpu_custom_call.1} parent=1 // loop_footer_branch
      %31 = sbr.rel target = $region3
    $region8: #{tpu_custom_call.1} parent=1 // loop_exit
      _
    %1284 = vsyncpa [#allocation4], 1
    %s1285 = scalar_lea.sflag [#allocation4], 1
    %1286 = vsyncpa %s1285, 1
    %1287 = vsyncpa [#allocation7], 1
    %s1288 = scalar_lea.sflag [#allocation7], 1
    %1289 = vsyncpa %s1288, 1
    %1290 = vsyncpa [#allocation10], 1
    %1291 = vsyncpa [#allocation5], 1
    %s1292 = scalar_lea.sflag [#allocation5], 1
    %1293 = vsyncpa %s1292, 1

</llo_original>
